<compile_context>
chip_gen: v6e
topology: v6e:2x2x1
jax: 0.10.0
libtpu: 0.0.40
codegen_flags: <defaults>
</compile_context>

<pallas_src>
import functools

import jax
import jax.numpy as jnp
from jax.experimental import pallas as pl
from jax.experimental.pallas import tpu as pltpu

_LANE = 128


def _round_up(v, m):
    return ((v + m - 1) // m) * m


def _mish(x):
    # torch.nn.Mish: x * tanh(softplus(x))
    return x * jnp.tanh(jax.nn.softplus(x))


# ----------------------------------------------------------------------------------
# Fused kernel: one batch element per grid step, everything VMEM-resident.
# ----------------------------------------------------------------------------------
def _residual_block_kernel(x_ref, t_ref, w0_ref, w1_ref, tw_ref, rw_ref,
                           vecs_ref, mem_ref, memt_ref, o_ref, pad_ref,
                           *, K, T, pad, inv_n, eps, identity_residual):
    f32 = jnp.float32
    bf16 = jnp.bfloat16

    vecs = vecs_ref[...]                                   # (8, Cout_p) f32
    b0, g0, be0 = vecs[0:1], vecs[1:2], vecs[2:3]
    b1, g1, be1 = vecs[3:4], vecs[4:5], vecs[5:6]
    tb, rb = vecs[6:7], vecs[7:8]
    mem, memt = mem_ref[...], memt_ref[...]                # (Cout_p,Gp), (Gp,Cout_p)

    def group_norm_mish(h, gamma, beta):
        # Per-group stats over (T x cg) real elements.  Group membership comes from the
        # precomputed one-hot maps; padded channels belong to no group, so statistics
        # are not polluted.  Centered variance, clamped >= 0 (review correctness note).
        mean_c = jnp.dot(jnp.dot(jnp.sum(h, axis=0, keepdims=True), mem) * inv_n,
                         memt, preferred_element_type=f32)
        d = h - mean_c
        var_c = jnp.dot(jnp.dot(jnp.sum(d * d, axis=0, keepdims=True), mem) * inv_n,
                        memt, preferred_element_type=f32)
        inv = jax.lax.rsqrt(jnp.maximum(var_c, 0.0) + eps)
        return _mish(d * inv * gamma + beta)

    # ---- blocks[0]: Conv1d(K, padding=K//2) -> GroupNorm(8) -> Mish ----------------
    # K shifted matmuls over the time-padded, VMEM-resident input (no im2col).
    h0 = jnp.dot(x_ref[0, 0:T, :].astype(bf16), w0_ref[0], preferred_element_type=f32)
    for k in range(1, K):
        h0 = h0 + jnp.dot(x_ref[0, k:k + T, :].astype(bf16), w0_ref[k],
                          preferred_element_type=f32)
    out0 = group_norm_mish(h0 + b0, g0, be0)

    # ---- time_mlp: Mish -> Linear -> broadcast over horizon (fused, no extra call) --
    temb = jnp.dot(_mish(t_ref[0]).astype(bf16), tw_ref[...],
                   preferred_element_type=f32) + tb        # (1, Cout_p)
    out0 = out0 + temb

    # ---- blocks[1]: Conv1d(K) -> GroupNorm(8) -> Mish (input stays in VMEM) --------
    pad_ref[...] = jnp.zeros_like(pad_ref)
    pad_ref[pad:pad + T, :] = out0
    h1 = jnp.dot(pad_ref[0:T, :].astype(bf16), w1_ref[0], preferred_element_type=f32)
    for k in range(1, K):
        h1 = h1 + jnp.dot(pad_ref[k:k + T, :].astype(bf16), w1_ref[k],
                          preferred_element_type=f32)
    out1 = group_norm_mish(h1 + b1, g1, be1)

    # ---- residual: Conv1d(1x1) or Identity -----------------------------------------
    # TODO(synk): nn.Dropout(0.5) on the residual input is eval-mode identity here.
    xr = x_ref[0, pad:pad + T, :]
    if identity_residual:
        res = xr
    else:
        res = jnp.dot(xr.astype(bf16), rw_ref[...], preferred_element_type=f32) + rb

    o_ref[0] = out1 + res


# ----------------------------------------------------------------------------------
# Wrapper
# ----------------------------------------------------------------------------------
def residual_temporal_block(packed, x, t):
    """Fused ResidualTemporalBlock forward.  x: (B, Cin, L), t: (B, E) -> (B, Cout, L)."""
    cfg = packed['cfg']
    B, Cin, L = x.shape
    K, pad = cfg['K'], cfg['pad']
    Cin_p, Cout_p, E_p, G_p = cfg['cin_p'], cfg['cout_p'], cfg['e_p'], cfg['g_p']
    Tp = L + 2 * pad

    # channels-last; pad channels to the 128-lane width and time by the conv halo.
    xt = jnp.transpose(x, (0, 2, 1)).astype(jnp.float32)
    xt = jnp.pad(xt, ((0, 0), (pad, pad), (0, Cin_p - Cin)))
    tp = jnp.pad(t.astype(jnp.float32), ((0, 0), (0, E_p - t.shape[1])))[:, None, :]

    kern = functools.partial(
        _residual_block_kernel, K=K, T=L, pad=pad,
        inv_n=1.0 / float(L * cfg['cg']), eps=1e-5,
        identity_residual=cfg['identity_residual'])

    out = pl.pallas_call(
        kern,
        out_shape=jax.ShapeDtypeStruct((B, L, Cout_p), jnp.float32),
        grid=(B,),
        in_specs=[
            pl.BlockSpec((1, Tp, Cin_p), lambda b: (b, 0, 0)),       # x (time-padded)
            pl.BlockSpec((1, 1, E_p), lambda b: (b, 0, 0)),          # t
            pl.BlockSpec((K, Cin_p, Cout_p), lambda b: (0, 0, 0)),   # conv0 taps
            pl.BlockSpec((K, Cout_p, Cout_p), lambda b: (0, 0, 0)),  # conv1 taps
            pl.BlockSpec((E_p, Cout_p), lambda b: (0, 0)),           # time Linear
            pl.BlockSpec((Cin_p, Cout_p), lambda b: (0, 0)),         # residual 1x1 conv
            pl.BlockSpec((8, Cout_p), lambda b: (0, 0)),             # biases / GN affine
            pl.BlockSpec((Cout_p, G_p), lambda b: (0, 0)),           # group one-hot
            pl.BlockSpec((G_p, Cout_p), lambda b: (0, 0)),           # its transpose
        ],
        out_specs=pl.BlockSpec((1, L, Cout_p), lambda b: (b, 0, 0)),
        scratch_shapes=[pltpu.VMEM((Tp, Cout_p), jnp.float32)],
        compiler_params=pltpu.CompilerParams(
            dimension_semantics=("parallel",)),   # v7x: shard the batch over 2 TCs
    )(xt, tp, packed['w0'], packed['w1'], packed['tw'], packed['rw'],
      packed['vecs'], packed['member'], packed['member_t'])

    return jnp.transpose(out[:, :, :cfg['cout']], (0, 2, 1))


# ----------------------------------------------------------------------------------
# Parameter init (torch layouts) + one-time repacking into the kernel layout.
# ----------------------------------------------------------------------------------
def init_raw_params(key, inp_channels, out_channels, embed_dim, kernel_size=3, scale=0.05):
    ks = jax.random.split(key, 12)
    n = lambda k, shape: scale * jax.random.normal(k, shape, jnp.float32)
    raw = {
        'w0': n(ks[0], (out_channels, inp_channels, kernel_size)),
        'b0': n(ks[1], (out_channels,)),
        'g0': 1.0 + n(ks[2], (out_channels,)),
        'be0': n(ks[3], (out_channels,)),
        # NOTE: torch zero-inits blocks[1] (if_zero=True); forward semantics are
        # parameter-agnostic, so random init here keeps the second block exercised.
        'w1': n(ks[4], (out_channels, out_channels, kernel_size)),
        'b1': n(ks[5], (out_channels,)),
        'g1': 1.0 + n(ks[6], (out_channels,)),
        'be1': n(ks[7], (out_channels,)),
        'tw': n(ks[8], (out_channels, embed_dim)),    # torch Linear weight (out, in)
        'tb': n(ks[9], (out_channels,)),
    }
    if inp_channels != out_channels:
        raw['rw'] = n(ks[10], (out_channels, inp_channels, 1))
        raw['rb'] = n(ks[11], (out_channels,))
    return raw


def pack_params(raw, inp_channels, out_channels, embed_dim, kernel_size=3, n_groups=8):
    """One-time repacking: lane-padded bf16 weights + f32 affine rows + group maps."""
    Cin, Cout, E, K = inp_channels, out_channels, embed_dim, kernel_size
    assert K % 2 == 1, "odd kernel_size only (torch padding=K//2 is 'same')"
    # TODO(synk): even kernel sizes (torch integer padding changes output length) unhandled.
    assert Cout % n_groups == 0
    Cin_p, Cout_p = _round_up(Cin, _LANE), _round_up(Cout, _LANE)
    E_p, G_p = _round_up(E, _LANE), _round_up(n_groups, _LANE)
    cg = Cout // n_groups
    identity_residual = 'rw' not in raw

    def pack_conv(w):                          # (Cout, Cin_, K) -> (K, Cin_p_, Cout_p) bf16
        cin_ = w.shape[1]
        buf = jnp.zeros((K, _round_up(cin_, _LANE), Cout_p), jnp.float32)
        buf = buf.at[:, :cin_, :Cout].set(jnp.transpose(w, (2, 1, 0)))
        return buf.astype(jnp.bfloat16)

    def pad_vec(v):
        return jnp.zeros((Cout_p,), jnp.float32).at[:Cout].set(v)

    tw = jnp.zeros((E_p, Cout_p), jnp.float32).at[:E, :Cout].set(raw['tw'].T)
    if identity_residual:
        rw = jnp.zeros((Cin_p, Cout_p), jnp.float32)     # unused (static identity path)
        rb = jnp.zeros((Cout,), jnp.float32)
    else:
        rw = jnp.zeros((Cin_p, Cout_p), jnp.float32).at[:Cin, :Cout].set(raw['rw'][:, :, 0].T)
        rb = raw['rb']

    vecs = jnp.stack([pad_vec(raw['b0']), pad_vec(raw['g0']), pad_vec(raw['be0']),
                      pad_vec(raw['b1']), pad_vec(raw['g1']), pad_vec(raw['be1']),
                      pad_vec(raw['tb']), pad_vec(rb)], axis=0)          # (8, Cout_p)

    ch = jnp.arange(Cout_p)
    member = (((ch[:, None] // cg) == jnp.arange(G_p)[None, :]) &
              (ch[:, None] < Cout)).astype(jnp.float32)                  # (Cout_p, G_p)

    return {
        'w0': pack_conv(raw['w0']), 'w1': pack_conv(raw['w1']),
        'tw': tw.astype(jnp.bfloat16), 'rw': rw.astype(jnp.bfloat16),
        'vecs': vecs, 'member': member, 'member_t': member.T,
        'cfg': dict(K=K, pad=K // 2, cout=Cout, cin_p=Cin_p, cout_p=Cout_p,
                    e_p=E_p, g_p=G_p, cg=cg, identity_residual=identity_residual),
    }


# ----------------------------------------------------------------------------------
# Plain-JAX reference (mirrors the PyTorch module, f32, eval mode) for validation.
# ----------------------------------------------------------------------------------
def reference_forward(raw, x, t, n_groups=8, eps=1e-5):
    def conv1d_same(h, w, b):                  # h: (B, C, L), w: (Cout, Cin, K)
        Kk = w.shape[-1]
        p, L = Kk // 2, h.shape[-1]
        hp = jnp.pad(h, ((0, 0), (0, 0), (p, p)))
        acc = jnp.zeros((h.shape[0], w.shape[0], L), jnp.float32)
        for k in range(Kk):
            acc = acc + jnp.einsum('bcl,oc->bol', hp[:, :, k:k + L], w[:, :, k])
        return acc + b[None, :, None]

    def group_norm(h, gamma, beta):
        B, C, L = h.shape
        hg = h.reshape(B, n_groups, -1)
        m = hg.mean(axis=2, keepdims=True)
        v = ((hg - m) ** 2).mean(axis=2, keepdims=True)
        hn = ((hg - m) * jax.lax.rsqrt(v + eps)).reshape(B, C, L)
        return hn * gamma[None, :, None] + beta[None, :, None]

    out = _mish(group_norm(conv1d_same(x, raw['w0'], raw['b0']), raw['g0'], raw['be0']))
    temb = _mish(t) @ raw['tw'].T + raw['tb']
    out = out + temb[:, :, None]
    out = _mish(group_norm(conv1d_same(out, raw['w1'], raw['b1']), raw['g1'], raw['be1']))
    res = (jnp.einsum('bcl,oc->bol', x, raw['rw'][:, :, 0]) + raw['rb'][None, :, None]
           if 'rw' in raw else x)
    return out + res


# ----------------------------------------------------------------------------------
if __name__ == "__main__":
    root = jax.random.PRNGKey(0)
    B, L = 2, 16
    cases = [
        dict(inp_channels=4, out_channels=32, embed_dim=32),    # residual 1x1-conv path
        dict(inp_channels=32, out_channels=32, embed_dim=32),   # identity residual path
    ]
    keys = jax.random.split(root, 3 * len(cases))
    for i, c in enumerate(cases):
        kp, kx, kt = keys[3 * i], keys[3 * i + 1], keys[3 * i + 2]
        raw = init_raw_params(kp, c['inp_channels'], c['out_channels'], c['embed_dim'])
        packed = pack_params(raw, c['inp_channels'], c['out_channels'], c['embed_dim'])

        x = jax.random.normal(kx, (B, c['inp_channels'], L), jnp.float32)
        t = jax.random.normal(kt, (B, c['embed_dim']), jnp.float32)

        out = jax.block_until_ready(residual_temporal_block(packed, x, t))
        assert out.shape == (B, c['out_channels'], L), out.shape
        assert bool(jnp.all(jnp.isfinite(out)))

        ref = reference_forward(raw, x, t)
        scale = float(jnp.maximum(1.0, jnp.max(jnp.abs(ref))))
        max_err = float(jnp.max(jnp.abs(out - ref)))
        # tolerance accounts for bf16 MXU operands vs the all-f32 reference
        assert max_err / scale < 8e-2, (max_err, scale)

    print("KERNEL_OK")
</pallas_src>

<mosaic_0001>
module attributes {stable_mosaic.version = 11 : i64} {
  func.func @_residual_block_kernel(%arg0: i32, %arg1: memref<1x18x128xf32, #tpu.memory_space<vmem>>, %arg2: memref<1x1x128xf32, #tpu.memory_space<vmem>>, %arg3: memref<3x128x128xbf16, #tpu.memory_space<vmem>>, %arg4: memref<3x128x128xbf16, #tpu.memory_space<vmem>>, %arg5: memref<128x128xbf16, #tpu.memory_space<vmem>>, %arg6: memref<128x128xbf16, #tpu.memory_space<vmem>>, %arg7: memref<8x128xf32, #tpu.memory_space<vmem>>, %arg8: memref<128x128xf32, #tpu.memory_space<vmem>>, %arg9: memref<128x128xf32, #tpu.memory_space<vmem>>, %arg10: memref<1x16x128xf32, #tpu.memory_space<vmem>>, %arg11: memref<18x128xf32, #tpu.memory_space<vmem>>) attributes {dimension_semantics = [#tpu.dimension_semantics<parallel>], iteration_bounds = array<i64: 2>, scalar_prefetch = 0 : i64, scratch_operands = 1 : i64, tpu.core_type = #tpu.core_type<tc>, window_params = [{transform_indices = @transform_0, window_bounds = array<i64: 1, 18, 128>}, {transform_indices = @transform_1, window_bounds = array<i64: 1, 1, 128>}, {pipeline_mode = #tpu.pipeline_mode<synchronous>, transform_indices = @transform_2, window_bounds = array<i64: 3, 128, 128>}, {pipeline_mode = #tpu.pipeline_mode<synchronous>, transform_indices = @transform_3, window_bounds = array<i64: 3, 128, 128>}, {pipeline_mode = #tpu.pipeline_mode<synchronous>, transform_indices = @transform_4, window_bounds = array<i64: 128, 128>}, {pipeline_mode = #tpu.pipeline_mode<synchronous>, transform_indices = @transform_5, window_bounds = array<i64: 128, 128>}, {pipeline_mode = #tpu.pipeline_mode<synchronous>, transform_indices = @transform_6, window_bounds = array<i64: 8, 128>}, {pipeline_mode = #tpu.pipeline_mode<synchronous>, transform_indices = @transform_7, window_bounds = array<i64: 128, 128>}, {pipeline_mode = #tpu.pipeline_mode<synchronous>, transform_indices = @transform_8, window_bounds = array<i64: 128, 128>}, {transform_indices = @transform_9, window_bounds = array<i64: 1, 16, 128>}]} {
    %c0 = arith.constant 0 : index
    %c0_0 = arith.constant 0 : index
    %0 = vector.load %arg7[%c0, %c0_0] : memref<8x128xf32, #tpu.memory_space<vmem>>, vector<8x128xf32>
    %1 = vector.extract_strided_slice %0 {offsets = [0, 0], sizes = [1, 128], strides = [1, 1]} : vector<8x128xf32> to vector<1x128xf32>
    %2 = vector.extract_strided_slice %0 {offsets = [1, 0], sizes = [1, 128], strides = [1, 1]} : vector<8x128xf32> to vector<1x128xf32>
    %3 = vector.extract_strided_slice %0 {offsets = [2, 0], sizes = [1, 128], strides = [1, 1]} : vector<8x128xf32> to vector<1x128xf32>
    %4 = vector.extract_strided_slice %0 {offsets = [3, 0], sizes = [1, 128], strides = [1, 1]} : vector<8x128xf32> to vector<1x128xf32>
    %5 = vector.extract_strided_slice %0 {offsets = [4, 0], sizes = [1, 128], strides = [1, 1]} : vector<8x128xf32> to vector<1x128xf32>
    %6 = vector.extract_strided_slice %0 {offsets = [5, 0], sizes = [1, 128], strides = [1, 1]} : vector<8x128xf32> to vector<1x128xf32>
    %7 = vector.extract_strided_slice %0 {offsets = [6, 0], sizes = [1, 128], strides = [1, 1]} : vector<8x128xf32> to vector<1x128xf32>
    %8 = vector.extract_strided_slice %0 {offsets = [7, 0], sizes = [1, 128], strides = [1, 1]} : vector<8x128xf32> to vector<1x128xf32>
    %c0_1 = arith.constant 0 : index
    %c0_2 = arith.constant 0 : index
    %9 = vector.load %arg8[%c0_1, %c0_2] : memref<128x128xf32, #tpu.memory_space<vmem>>, vector<128x128xf32>
    %c0_3 = arith.constant 0 : index
    %c0_4 = arith.constant 0 : index
    %10 = vector.load %arg9[%c0_3, %c0_4] : memref<128x128xf32, #tpu.memory_space<vmem>>, vector<128x128xf32>
    %c0_5 = arith.constant 0 : index
    %c0_6 = arith.constant 0 : index
    %c0_7 = arith.constant 0 : index
    %11 = vector.load %arg1[%c0_5, %c0_6, %c0_7] : memref<1x18x128xf32, #tpu.memory_space<vmem>>, vector<1x16x128xf32>
    %12 = vector.shape_cast %11 : vector<1x16x128xf32> to vector<16x128xf32>
    %13 = arith.truncf %12 : vector<16x128xf32> to vector<16x128xbf16>
    %c0_8 = arith.constant 0 : index
    %c0_9 = arith.constant 0 : index
    %c0_10 = arith.constant 0 : index
    %14 = vector.load %arg3[%c0_8, %c0_9, %c0_10] : memref<3x128x128xbf16, #tpu.memory_space<vmem>>, vector<1x128x128xbf16>
    %15 = vector.shape_cast %14 : vector<1x128x128xbf16> to vector<128x128xbf16>
    %cst = arith.constant dense<0.000000e+00> : vector<16x128xf32>
    %16 = tpu.matmul %13, %15, %cst {dimension_numbers = #tpu.dot_dimension_numbers<[1], [0], [0], [1], [0, 0, 1, 1], [], []>} : vector<16x128xbf16>, vector<128x128xbf16>, vector<16x128xf32> -> vector<16x128xf32>
    %c0_11 = arith.constant 0 : index
    %c1 = arith.constant 1 : index
    %c0_12 = arith.constant 0 : index
    %17 = vector.load %arg1[%c0_11, %c1, %c0_12] : memref<1x18x128xf32, #tpu.memory_space<vmem>>, vector<1x16x128xf32>
    %18 = vector.shape_cast %17 : vector<1x16x128xf32> to vector<16x128xf32>
    %19 = arith.truncf %18 : vector<16x128xf32> to vector<16x128xbf16>
    %c1_13 = arith.constant 1 : index
    %c0_14 = arith.constant 0 : index
    %c0_15 = arith.constant 0 : index
    %20 = vector.load %arg3[%c1_13, %c0_14, %c0_15] : memref<3x128x128xbf16, #tpu.memory_space<vmem>>, vector<1x128x128xbf16>
    %21 = vector.shape_cast %20 : vector<1x128x128xbf16> to vector<128x128xbf16>
    %cst_16 = arith.constant dense<0.000000e+00> : vector<16x128xf32>
    %22 = tpu.matmul %19, %21, %cst_16 {dimension_numbers = #tpu.dot_dimension_numbers<[1], [0], [0], [1], [0, 0, 1, 1], [], []>} : vector<16x128xbf16>, vector<128x128xbf16>, vector<16x128xf32> -> vector<16x128xf32>
    %23 = arith.addf %16, %22 : vector<16x128xf32>
    %c0_17 = arith.constant 0 : index
    %c2 = arith.constant 2 : index
    %c0_18 = arith.constant 0 : index
    %24 = vector.load %arg1[%c0_17, %c2, %c0_18] : memref<1x18x128xf32, #tpu.memory_space<vmem>>, vector<1x16x128xf32>
    %25 = vector.shape_cast %24 : vector<1x16x128xf32> to vector<16x128xf32>
    %26 = arith.truncf %25 : vector<16x128xf32> to vector<16x128xbf16>
    %c2_19 = arith.constant 2 : index
    %c0_20 = arith.constant 0 : index
    %c0_21 = arith.constant 0 : index
    %27 = vector.load %arg3[%c2_19, %c0_20, %c0_21] : memref<3x128x128xbf16, #tpu.memory_space<vmem>>, vector<1x128x128xbf16>
    %28 = vector.shape_cast %27 : vector<1x128x128xbf16> to vector<128x128xbf16>
    %cst_22 = arith.constant dense<0.000000e+00> : vector<16x128xf32>
    %29 = tpu.matmul %26, %28, %cst_22 {dimension_numbers = #tpu.dot_dimension_numbers<[1], [0], [0], [1], [0, 0, 1, 1], [], []>} : vector<16x128xbf16>, vector<128x128xbf16>, vector<16x128xf32> -> vector<16x128xf32>
    %30 = arith.addf %23, %29 : vector<16x128xf32>
    %31 = vector.broadcast %1 : vector<1x128xf32> to vector<16x128xf32>
    %32 = arith.addf %30, %31 : vector<16x128xf32>
    %cst_23 = arith.constant dense<0.000000e+00> : vector<128xf32>
    %33 = vector.multi_reduction <add>, %32, %cst_23 [0] : vector<16x128xf32> to vector<128xf32>
    %34 = vector.shape_cast %33 : vector<128xf32> to vector<1x128xf32>
    %cst_24 = arith.constant dense<0.000000e+00> : vector<1x128xf32>
    %35 = tpu.matmul %34, %9, %cst_24 {dimension_numbers = #tpu.dot_dimension_numbers<[1], [0], [0], [1], [0, 0, 1, 1], [], []>} : vector<1x128xf32>, vector<128x128xf32>, vector<1x128xf32> -> vector<1x128xf32>
    %cst_25 = arith.constant 1.562500e-02 : f32
    %36 = vector.broadcast %cst_25 : f32 to vector<1x128xf32>
    %37 = arith.mulf %35, %36 : vector<1x128xf32>
    %cst_26 = arith.constant dense<0.000000e+00> : vector<1x128xf32>
    %38 = tpu.matmul %37, %10, %cst_26 {dimension_numbers = #tpu.dot_dimension_numbers<[1], [0], [0], [1], [0, 0, 1, 1], [], []>} : vector<1x128xf32>, vector<128x128xf32>, vector<1x128xf32> -> vector<1x128xf32>
    %39 = vector.broadcast %38 : vector<1x128xf32> to vector<16x128xf32>
    %40 = arith.subf %32, %39 : vector<16x128xf32>
    %41 = arith.mulf %40, %40 : vector<16x128xf32>
    %cst_27 = arith.constant dense<0.000000e+00> : vector<128xf32>
    %42 = vector.multi_reduction <add>, %41, %cst_27 [0] : vector<16x128xf32> to vector<128xf32>
    %43 = vector.shape_cast %42 : vector<128xf32> to vector<1x128xf32>
    %cst_28 = arith.constant dense<0.000000e+00> : vector<1x128xf32>
    %44 = tpu.matmul %43, %9, %cst_28 {dimension_numbers = #tpu.dot_dimension_numbers<[1], [0], [0], [1], [0, 0, 1, 1], [], []>} : vector<1x128xf32>, vector<128x128xf32>, vector<1x128xf32> -> vector<1x128xf32>
    %cst_29 = arith.constant 1.562500e-02 : f32
    %45 = vector.broadcast %cst_29 : f32 to vector<1x128xf32>
    %46 = arith.mulf %44, %45 : vector<1x128xf32>
    %cst_30 = arith.constant dense<0.000000e+00> : vector<1x128xf32>
    %47 = tpu.matmul %46, %10, %cst_30 {dimension_numbers = #tpu.dot_dimension_numbers<[1], [0], [0], [1], [0, 0, 1, 1], [], []>} : vector<1x128xf32>, vector<128x128xf32>, vector<1x128xf32> -> vector<1x128xf32>
    %cst_31 = arith.constant 0.000000e+00 : f32
    %48 = vector.broadcast %cst_31 : f32 to vector<1x128xf32>
    %49 = arith.maximumf %47, %48 : vector<1x128xf32>
    %cst_32 = arith.constant 9.99999974E-6 : f32
    %50 = vector.broadcast %cst_32 : f32 to vector<1x128xf32>
    %51 = arith.addf %49, %50 : vector<1x128xf32>
    %52 = math.rsqrt %51 : vector<1x128xf32>
    %53 = vector.broadcast %52 : vector<1x128xf32> to vector<16x128xf32>
    %54 = arith.mulf %40, %53 : vector<16x128xf32>
    %55 = vector.broadcast %2 : vector<1x128xf32> to vector<16x128xf32>
    %56 = arith.mulf %54, %55 : vector<16x128xf32>
    %57 = vector.broadcast %3 : vector<1x128xf32> to vector<16x128xf32>
    %58 = arith.addf %56, %57 : vector<16x128xf32>
    %cst_33 = arith.constant 0.000000e+00 : f32
    %59 = vector.broadcast %cst_33 : f32 to vector<16x128xf32>
    %60 = arith.maximumf %58, %59 : vector<16x128xf32>
    %61 = vector.broadcast %cst_33 : f32 to vector<16x128xf32>
    %62 = arith.subf %58, %61 : vector<16x128xf32>
    %63 = arith.cmpf one, %62, %62 : vector<16x128xf32>
    %64 = vector.broadcast %cst_33 : f32 to vector<16x128xf32>
    %65 = arith.addf %58, %64 : vector<16x128xf32>
    %66 = math.absf %62 : vector<16x128xf32>
    %cst_34 = arith.constant 0.000000e+00 : f32
    %67 = vector.broadcast %cst_34 : f32 to vector<16x128xf32>
    %68 = arith.subf %67, %66 : vector<16x128xf32>
    %69 = math.exp %68 : vector<16x128xf32>
    %70 = math.log1p %69 : vector<16x128xf32>
    %71 = arith.addf %60, %70 : vector<16x128xf32>
    %72 = arith.select %63, %65, %71 : vector<16x128xi1>, vector<16x128xf32>
    %73 = math.tanh %72 : vector<16x128xf32>
    %74 = arith.mulf %58, %73 : vector<16x128xf32>
    %c0_35 = arith.constant 0 : index
    %c0_36 = arith.constant 0 : index
    %c0_37 = arith.constant 0 : index
    %75 = vector.load %arg2[%c0_35, %c0_36, %c0_37] : memref<1x1x128xf32, #tpu.memory_space<vmem>>, vector<1x1x128xf32>
    %76 = vector.shape_cast %75 : vector<1x1x128xf32> to vector<1x128xf32>
    %cst_38 = arith.constant 0.000000e+00 : f32
    %77 = vector.broadcast %cst_38 : f32 to vector<1x128xf32>
    %78 = arith.maximumf %76, %77 : vector<1x128xf32>
    %79 = vector.broadcast %cst_38 : f32 to vector<1x128xf32>
    %80 = arith.subf %76, %79 : vector<1x128xf32>
    %81 = arith.cmpf one, %80, %80 : vector<1x128xf32>
    %82 = vector.broadcast %cst_38 : f32 to vector<1x128xf32>
    %83 = arith.addf %76, %82 : vector<1x128xf32>
    %84 = math.absf %80 : vector<1x128xf32>
    %cst_39 = arith.constant 0.000000e+00 : f32
    %85 = vector.broadcast %cst_39 : f32 to vector<1x128xf32>
    %86 = arith.subf %85, %84 : vector<1x128xf32>
    %87 = math.exp %86 : vector<1x128xf32>
    %88 = math.log1p %87 : vector<1x128xf32>
    %89 = arith.addf %78, %88 : vector<1x128xf32>
    %90 = arith.select %81, %83, %89 : vector<1x128xi1>, vector<1x128xf32>
    %91 = math.tanh %90 : vector<1x128xf32>
    %92 = arith.mulf %76, %91 : vector<1x128xf32>
    %93 = arith.truncf %92 : vector<1x128xf32> to vector<1x128xbf16>
    %c0_40 = arith.constant 0 : index
    %c0_41 = arith.constant 0 : index
    %94 = vector.load %arg5[%c0_40, %c0_41] : memref<128x128xbf16, #tpu.memory_space<vmem>>, vector<128x128xbf16>
    %cst_42 = arith.constant dense<0.000000e+00> : vector<1x128xf32>
    %95 = tpu.matmul %93, %94, %cst_42 {dimension_numbers = #tpu.dot_dimension_numbers<[1], [0], [0], [1], [0, 0, 1, 1], [], []>} : vector<1x128xbf16>, vector<128x128xbf16>, vector<1x128xf32> -> vector<1x128xf32>
    %96 = arith.addf %95, %7 : vector<1x128xf32>
    %97 = vector.broadcast %96 : vector<1x128xf32> to vector<16x128xf32>
    %98 = arith.addf %74, %97 : vector<16x128xf32>
    %cst_43 = arith.constant 0.000000e+00 : f32
    %99 = vector.broadcast %cst_43 : f32 to vector<18x128xf32>
    %c0_44 = arith.constant 0 : index
    %c0_45 = arith.constant 0 : index
    %100 = vector.load %arg11[%c0_44, %c0_45] : memref<18x128xf32, #tpu.memory_space<vmem>>, vector<18x128xf32>
    tpu.vector_store %arg11[%c0_44, %c0_45], %99 {strides = array<i32>} : memref<18x128xf32, #tpu.memory_space<vmem>>, vector<18x128xf32>,
    %c1_46 = arith.constant 1 : index
    %c0_47 = arith.constant 0 : index
    %101 = vector.load %arg11[%c1_46, %c0_47] : memref<18x128xf32, #tpu.memory_space<vmem>>, vector<16x128xf32>
    tpu.vector_store %arg11[%c1_46, %c0_47], %98 {strides = array<i32>} : memref<18x128xf32, #tpu.memory_space<vmem>>, vector<16x128xf32>,
    %c0_48 = arith.constant 0 : index
    %c0_49 = arith.constant 0 : index
    %102 = vector.load %arg11[%c0_48, %c0_49] : memref<18x128xf32, #tpu.memory_space<vmem>>, vector<16x128xf32>
    %103 = arith.truncf %102 : vector<16x128xf32> to vector<16x128xbf16>
    %c0_50 = arith.constant 0 : index
    %c0_51 = arith.constant 0 : index
    %c0_52 = arith.constant 0 : index
    %104 = vector.load %arg4[%c0_50, %c0_51, %c0_52] : memref<3x128x128xbf16, #tpu.memory_space<vmem>>, vector<1x128x128xbf16>
    %105 = vector.shape_cast %104 : vector<1x128x128xbf16> to vector<128x128xbf16>
    %cst_53 = arith.constant dense<0.000000e+00> : vector<16x128xf32>
    %106 = tpu.matmul %103, %105, %cst_53 {dimension_numbers = #tpu.dot_dimension_numbers<[1], [0], [0], [1], [0, 0, 1, 1], [], []>} : vector<16x128xbf16>, vector<128x128xbf16>, vector<16x128xf32> -> vector<16x128xf32>
    %c1_54 = arith.constant 1 : index
    %c0_55 = arith.constant 0 : index
    %107 = vector.load %arg11[%c1_54, %c0_55] : memref<18x128xf32, #tpu.memory_space<vmem>>, vector<16x128xf32>
    %108 = arith.truncf %107 : vector<16x128xf32> to vector<16x128xbf16>
    %c1_56 = arith.constant 1 : index
    %c0_57 = arith.constant 0 : index
    %c0_58 = arith.constant 0 : index
    %109 = vector.load %arg4[%c1_56, %c0_57, %c0_58] : memref<3x128x128xbf16, #tpu.memory_space<vmem>>, vector<1x128x128xbf16>
    %110 = vector.shape_cast %109 : vector<1x128x128xbf16> to vector<128x128xbf16>
    %cst_59 = arith.constant dense<0.000000e+00> : vector<16x128xf32>
    %111 = tpu.matmul %108, %110, %cst_59 {dimension_numbers = #tpu.dot_dimension_numbers<[1], [0], [0], [1], [0, 0, 1, 1], [], []>} : vector<16x128xbf16>, vector<128x128xbf16>, vector<16x128xf32> -> vector<16x128xf32>
    %112 = arith.addf %106, %111 : vector<16x128xf32>
    %c2_60 = arith.constant 2 : index
    %c0_61 = arith.constant 0 : index
    %113 = vector.load %arg11[%c2_60, %c0_61] : memref<18x128xf32, #tpu.memory_space<vmem>>, vector<16x128xf32>
    %114 = arith.truncf %113 : vector<16x128xf32> to vector<16x128xbf16>
    %c2_62 = arith.constant 2 : index
    %c0_63 = arith.constant 0 : index
    %c0_64 = arith.constant 0 : index
    %115 = vector.load %arg4[%c2_62, %c0_63, %c0_64] : memref<3x128x128xbf16, #tpu.memory_space<vmem>>, vector<1x128x128xbf16>
    %116 = vector.shape_cast %115 : vector<1x128x128xbf16> to vector<128x128xbf16>
    %cst_65 = arith.constant dense<0.000000e+00> : vector<16x128xf32>
    %117 = tpu.matmul %114, %116, %cst_65 {dimension_numbers = #tpu.dot_dimension_numbers<[1], [0], [0], [1], [0, 0, 1, 1], [], []>} : vector<16x128xbf16>, vector<128x128xbf16>, vector<16x128xf32> -> vector<16x128xf32>
    %118 = arith.addf %112, %117 : vector<16x128xf32>
    %119 = vector.broadcast %4 : vector<1x128xf32> to vector<16x128xf32>
    %120 = arith.addf %118, %119 : vector<16x128xf32>
    %cst_66 = arith.constant dense<0.000000e+00> : vector<128xf32>
    %121 = vector.multi_reduction <add>, %120, %cst_66 [0] : vector<16x128xf32> to vector<128xf32>
    %122 = vector.shape_cast %121 : vector<128xf32> to vector<1x128xf32>
    %cst_67 = arith.constant dense<0.000000e+00> : vector<1x128xf32>
    %123 = tpu.matmul %122, %9, %cst_67 {dimension_numbers = #tpu.dot_dimension_numbers<[1], [0], [0], [1], [0, 0, 1, 1], [], []>} : vector<1x128xf32>, vector<128x128xf32>, vector<1x128xf32> -> vector<1x128xf32>
    %cst_68 = arith.constant 1.562500e-02 : f32
    %124 = vector.broadcast %cst_68 : f32 to vector<1x128xf32>
    %125 = arith.mulf %123, %124 : vector<1x128xf32>
    %cst_69 = arith.constant dense<0.000000e+00> : vector<1x128xf32>
    %126 = tpu.matmul %125, %10, %cst_69 {dimension_numbers = #tpu.dot_dimension_numbers<[1], [0], [0], [1], [0, 0, 1, 1], [], []>} : vector<1x128xf32>, vector<128x128xf32>, vector<1x128xf32> -> vector<1x128xf32>
    %127 = vector.broadcast %126 : vector<1x128xf32> to vector<16x128xf32>
    %128 = arith.subf %120, %127 : vector<16x128xf32>
    %129 = arith.mulf %128, %128 : vector<16x128xf32>
    %cst_70 = arith.constant dense<0.000000e+00> : vector<128xf32>
    %130 = vector.multi_reduction <add>, %129, %cst_70 [0] : vector<16x128xf32> to vector<128xf32>
    %131 = vector.shape_cast %130 : vector<128xf32> to vector<1x128xf32>
    %cst_71 = arith.constant dense<0.000000e+00> : vector<1x128xf32>
    %132 = tpu.matmul %131, %9, %cst_71 {dimension_numbers = #tpu.dot_dimension_numbers<[1], [0], [0], [1], [0, 0, 1, 1], [], []>} : vector<1x128xf32>, vector<128x128xf32>, vector<1x128xf32> -> vector<1x128xf32>
    %cst_72 = arith.constant 1.562500e-02 : f32
    %133 = vector.broadcast %cst_72 : f32 to vector<1x128xf32>
    %134 = arith.mulf %132, %133 : vector<1x128xf32>
    %cst_73 = arith.constant dense<0.000000e+00> : vector<1x128xf32>
    %135 = tpu.matmul %134, %10, %cst_73 {dimension_numbers = #tpu.dot_dimension_numbers<[1], [0], [0], [1], [0, 0, 1, 1], [], []>} : vector<1x128xf32>, vector<128x128xf32>, vector<1x128xf32> -> vector<1x128xf32>
    %cst_74 = arith.constant 0.000000e+00 : f32
    %136 = vector.broadcast %cst_74 : f32 to vector<1x128xf32>
    %137 = arith.maximumf %135, %136 : vector<1x128xf32>
    %cst_75 = arith.constant 9.99999974E-6 : f32
    %138 = vector.broadcast %cst_75 : f32 to vector<1x128xf32>
    %139 = arith.addf %137, %138 : vector<1x128xf32>
    %140 = math.rsqrt %139 : vector<1x128xf32>
    %141 = vector.broadcast %140 : vector<1x128xf32> to vector<16x128xf32>
    %142 = arith.mulf %128, %141 : vector<16x128xf32>
    %143 = vector.broadcast %5 : vector<1x128xf32> to vector<16x128xf32>
    %144 = arith.mulf %142, %143 : vector<16x128xf32>
    %145 = vector.broadcast %6 : vector<1x128xf32> to vector<16x128xf32>
    %146 = arith.addf %144, %145 : vector<16x128xf32>
    %cst_76 = arith.constant 0.000000e+00 : f32
    %147 = vector.broadcast %cst_76 : f32 to vector<16x128xf32>
    %148 = arith.maximumf %146, %147 : vector<16x128xf32>
    %149 = vector.broadcast %cst_76 : f32 to vector<16x128xf32>
    %150 = arith.subf %146, %149 : vector<16x128xf32>
    %151 = arith.cmpf one, %150, %150 : vector<16x128xf32>
    %152 = vector.broadcast %cst_76 : f32 to vector<16x128xf32>
    %153 = arith.addf %146, %152 : vector<16x128xf32>
    %154 = math.absf %150 : vector<16x128xf32>
    %cst_77 = arith.constant 0.000000e+00 : f32
    %155 = vector.broadcast %cst_77 : f32 to vector<16x128xf32>
    %156 = arith.subf %155, %154 : vector<16x128xf32>
    %157 = math.exp %156 : vector<16x128xf32>
    %158 = math.log1p %157 : vector<16x128xf32>
    %159 = arith.addf %148, %158 : vector<16x128xf32>
    %160 = arith.select %151, %153, %159 : vector<16x128xi1>, vector<16x128xf32>
    %161 = math.tanh %160 : vector<16x128xf32>
    %162 = arith.mulf %146, %161 : vector<16x128xf32>
    %c0_78 = arith.constant 0 : index
    %c1_79 = arith.constant 1 : index
    %c0_80 = arith.constant 0 : index
    %163 = vector.load %arg1[%c0_78, %c1_79, %c0_80] : memref<1x18x128xf32, #tpu.memory_space<vmem>>, vector<1x16x128xf32>
    %164 = vector.shape_cast %163 : vector<1x16x128xf32> to vector<16x128xf32>
    %165 = arith.truncf %164 : vector<16x128xf32> to vector<16x128xbf16>
    %c0_81 = arith.constant 0 : index
    %c0_82 = arith.constant 0 : index
    %166 = vector.load %arg6[%c0_81, %c0_82] : memref<128x128xbf16, #tpu.memory_space<vmem>>, vector<128x128xbf16>
    %cst_83 = arith.constant dense<0.000000e+00> : vector<16x128xf32>
    %167 = tpu.matmul %165, %166, %cst_83 {dimension_numbers = #tpu.dot_dimension_numbers<[1], [0], [0], [1], [0, 0, 1, 1], [], []>} : vector<16x128xbf16>, vector<128x128xbf16>, vector<16x128xf32> -> vector<16x128xf32>
    %168 = vector.broadcast %8 : vector<1x128xf32> to vector<16x128xf32>
    %169 = arith.addf %167, %168 : vector<16x128xf32>
    %170 = arith.addf %162, %169 : vector<16x128xf32>
    %c0_84 = arith.constant 0 : index
    %c0_85 = arith.constant 0 : index
    %c0_86 = arith.constant 0 : index
    %171 = vector.load %arg10[%c0_84, %c0_85, %c0_86] : memref<1x16x128xf32, #tpu.memory_space<vmem>>, vector<1x16x128xf32>
    %172 = vector.shape_cast %171 : vector<1x16x128xf32> to vector<16x128xf32>
    %173 = vector.shape_cast %170 : vector<16x128xf32> to vector<1x16x128xf32>
    tpu.vector_store %arg10[%c0_84, %c0_85, %c0_86], %173 {strides = array<i32>} : memref<1x16x128xf32, #tpu.memory_space<vmem>>, vector<1x16x128xf32>,
    return
  }
  func.func @transform_0(%arg0: i32) -> (i32, i32, i32) {
    %c0_i32 = arith.constant 0 : i32
    %c0_i32_0 = arith.constant 0 : i32
    %c0_i32_1 = arith.constant 0 : i32
    return %arg0, %c0_i32, %c0_i32_0 : i32, i32, i32
  }
  func.func @transform_1(%arg0: i32) -> (i32, i32, i32) {
    %c0_i32 = arith.constant 0 : i32
    %c0_i32_0 = arith.constant 0 : i32
    %c0_i32_1 = arith.constant 0 : i32
    return %arg0, %c0_i32, %c0_i32_0 : i32, i32, i32
  }
  func.func @transform_2(%arg0: i32) -> (i32, i32, i32) {
    %c0_i32 = arith.constant 0 : i32
    %c0_i32_0 = arith.constant 0 : i32
    %c0_i32_1 = arith.constant 0 : i32
    %c0_i32_2 = arith.constant 0 : i32
    return %c0_i32, %c0_i32_0, %c0_i32_1 : i32, i32, i32
  }
  func.func @transform_3(%arg0: i32) -> (i32, i32, i32) {
    %c0_i32 = arith.constant 0 : i32
    %c0_i32_0 = arith.constant 0 : i32
    %c0_i32_1 = arith.constant 0 : i32
    %c0_i32_2 = arith.constant 0 : i32
    return %c0_i32, %c0_i32_0, %c0_i32_1 : i32, i32, i32
  }
  func.func @transform_4(%arg0: i32) -> (i32, i32) {
    %c0_i32 = arith.constant 0 : i32
    %c0_i32_0 = arith.constant 0 : i32
    %c0_i32_1 = arith.constant 0 : i32
    return %c0_i32, %c0_i32_0 : i32, i32
  }
  func.func @transform_5(%arg0: i32) -> (i32, i32) {
    %c0_i32 = arith.constant 0 : i32
    %c0_i32_0 = arith.constant 0 : i32
    %c0_i32_1 = arith.constant 0 : i32
    return %c0_i32, %c0_i32_0 : i32, i32
  }
  func.func @transform_6(%arg0: i32) -> (i32, i32) {
    %c0_i32 = arith.constant 0 : i32
    %c0_i32_0 = arith.constant 0 : i32
    %c0_i32_1 = arith.constant 0 : i32
    return %c0_i32, %c0_i32_0 : i32, i32
  }
  func.func @transform_7(%arg0: i32) -> (i32, i32) {
    %c0_i32 = arith.constant 0 : i32
    %c0_i32_0 = arith.constant 0 : i32
    %c0_i32_1 = arith.constant 0 : i32
    return %c0_i32, %c0_i32_0 : i32, i32
  }
  func.func @transform_8(%arg0: i32) -> (i32, i32) {
    %c0_i32 = arith.constant 0 : i32
    %c0_i32_0 = arith.constant 0 : i32
    %c0_i32_1 = arith.constant 0 : i32
    return %c0_i32, %c0_i32_0 : i32, i32
  }
  func.func @transform_9(%arg0: i32) -> (i32, i32, i32) {
    %c0_i32 = arith.constant 0 : i32
    %c0_i32_0 = arith.constant 0 : i32
    %c0_i32_1 = arith.constant 0 : i32
    return %arg0, %c0_i32, %c0_i32_0 : i32, i32, i32
  }
}

</mosaic_0001>

<llo_original>
// kernel: tpu_custom_call.1
$region0: #{tpu_custom_call.1}
  #allocation0 [shape = 'u32[]', space=smem, size = 0x4, offset = 0x4, fixed_abs, tag = 'smem constant byte address 0x4 - core index']
  #allocation1 [shape = 'u32[144,128]{1,0:T(1,128)}', space=vmem, size = 0x12000, scoped, tag = 'internal scratch']
  #allocation2 [shape = 'f32[18,128]{1,0:T(8,128)}', space=vmem, size = 0x3000, scoped, tag = 'scratch operand']
  %s0 = inlined_call_operand.vmem [shape: f32[2,18,128], index: 0, kind: input, shape index: {}]
  %s1 = inlined_call_operand.vmem [shape: f32[2,1,128], index: 1, kind: input, shape index: {}]
  %s2 = inlined_call_operand.hbm [shape: bf16[3,128,128], index: 2, kind: input, shape index: {}]
  %s3 = inlined_call_operand.hbm [shape: bf16[3,128,128], index: 3, kind: input, shape index: {}]
  %s4 = inlined_call_operand.vmem [shape: bf16[128,128], index: 4, kind: input, shape index: {}]
  %s5 = inlined_call_operand.hbm [shape: bf16[128,128], index: 5, kind: input, shape index: {}]
  %s6 = inlined_call_operand.vmem [shape: f32[8,128], index: 6, kind: input, shape index: {}]
  %s7 = inlined_call_operand.hbm [shape: f32[128,128], index: 7, kind: input, shape index: {}]
  %s8 = inlined_call_operand.hbm [shape: f32[128,128], index: 8, kind: input, shape index: {}]
  %s9 = inlined_call_operand.hbm [shape: f32[2,16,128], index: 9, kind: output, shape index: {}]
  %s10 = sld [smem:[#allocation0]]
  $region89: #{tpu_custom_call.1} parent=0
    _
  %s12 = ssub.s32 1, %s10
  %s13 = scalar_select 0, %s12, %s10
  $region1: #{tpu_custom_call.1} parent=0
    #allocation3 [shape = 'u8[98304]{0}', space=vmem, size = 0x18000, scoped, tag = 'input window, operand 2, single buffered']
    #allocation4 [shape = 's32[2]{0}', space=sflag, size = 0x8, scoped, tag = 'scoped memory for tpu_custom_call.1']
    #allocation5 [shape = 's32[2]{0}', space=sflag, size = 0x8, scoped, tag = 'scoped memory for tpu_custom_call.1']
    #allocation6 [shape = 'u8[98304]{0}', space=vmem, size = 0x18000, scoped, tag = 'input window, operand 3, single buffered']
    #allocation7 [shape = 's32[1]{0}', space=sflag, size = 0x4, scoped, tag = 'scoped memory for tpu_custom_call.1']
    #allocation8 [shape = 'u8[32768]{0}', space=vmem, size = 0x8000, scoped, tag = 'input window, operand 5, single buffered']
    #allocation9 [shape = 'u8[65536]{0}', space=vmem, size = 0x10000, scoped, tag = 'input window, operand 7, single buffered']
    #allocation10 [shape = 's32[1]{0}', space=sflag, size = 0x4, scoped, tag = 'scoped memory for tpu_custom_call.1']
    #allocation11 [shape = 'u8[65536]{0}', space=vmem, size = 0x10000, scoped, tag = 'input window, operand 8, single buffered']
    #allocation12 [shape = 'u8[16384]{0}', space=vmem, size = 0x4000, scoped, tag = 'output window, operand 0']
    %14 = vsyncpa [#allocation4], 0
    %15 = vsyncpa [#allocation7], 0
    %16 = vsyncpa [#allocation10], 0
    %17 = vsyncpa [#allocation5], 0
    %s18 = scalar_lea.sflag [#allocation5], 1
    %19 = vsyncpa %s18, 0
    loop: start=0, step=1, limit=4
    $region2: #{tpu_custom_call.1} parent=1 // loop_pre_header
      _
    $region3: #{tpu_custom_call.1} parent=1 // loop_header
      %s21 = sphi 0, %s25
      %p22 = scmp.ge.s32.totalorder %s21, 4
      %s31 = sphi 0, %s33
      %s34 = sphi 0, %s31
      %s35 = sphi 0, %s34
      %s51 = sphi 0, %s35
      %s57 = sphi 0, %s59
      %s60 = sphi 0, %s57
      %s61 = sphi 0, %s60
      %s77 = sphi 0, %s61
      %s81 = sphi 0, %s81
      %s83 = sphi 0, %s81
      %s84 = sphi 0, %s83
      %s98 = sphi 0, %s84
      %s102 = sphi 0, %s102
      %s104 = sphi 0, %s102
      %s105 = sphi 0, %s104
      %s119 = sphi 0, %s105
      %s123 = sphi 0, %s123
      %s125 = sphi 0, %s123
      %s126 = sphi 0, %s125
      %s140 = sphi 0, %s126
      %s144 = sphi 0, %s144
      %s146 = sphi 0, %s144
      %s147 = sphi 0, %s146
      %s161 = sphi 0, %s147
      %s165 = sphi 0, %s165
      %s167 = sphi 0, %s165
      %s168 = sphi 0, %s167
      %s182 = sphi 0, %s168
      %s186 = sphi 0, %s186
      %s188 = sphi 0, %s186
      %s189 = sphi 0, %s188
      %s203 = sphi 0, %s189
      %s207 = sphi 0, %s207
      %s209 = sphi 0, %s207
      %s210 = sphi 0, %s209
      %s224 = sphi 0, %s210
      %s230 = sphi 0, %s232
      %s233 = sphi 0, %s230
      %s234 = sphi 0, %s233
      %s250 = sphi 0, %s234
    $region4: #{tpu_custom_call.1} parent=1 // loop_header_branch
      %24 = sbr.rel (%p22) target = $region8
    $region5: #{tpu_custom_call.1} parent=1 // loop_body
      %s26 = ssub.s32 %s21, 1
      %s27 = ssub.s32 %s21, 2
      %s28 = sadd.s32 %s21, 1
      %s29 = ssub.s32 %s21, %s28
      %p30 = scmp.eq.s32.totalorder %s29, 0
      %s32 = sadd.s32 %s31, 1
      %s33 = scalar_select %p30, %s31, %s32
      %p36 = pneg %p30
      %p37 = scmp.eq.s32.totalorder %s21, 1
      %p38 = por %p36, %p37
      %p39 = scmp.ne.s32.totalorder %s31, %s34
      %p40 = scmp.eq.s32.totalorder %s21, 0
      %p41 = por %p39, %p40
      %p42 = scmp.ne.s32.totalorder %s31, %s34
      %p43 = scmp.eq.s32.totalorder %s26, 1
      %p44 = por %p42, %p43
      %p45 = scmp.ne.s32.totalorder %s34, %s35
      %p46 = scmp.eq.s32.totalorder %s26, 0
      %p47 = por %p45, %p46
      %p48 = scmp.ne.s32.totalorder %s34, %s35
      %p49 = scmp.eq.s32.totalorder %s27, 1
      %p50 = por %p48, %p49
      %p52 = scmp.ne.s32.totalorder %s35, %s51
      %p53 = scmp.eq.s32.totalorder %s27, 0
      %p54 = por %p52, %p53
      %s55 = ssub.s32 %s21, %s28
      %p56 = scmp.eq.s32.totalorder %s55, 0
      %s58 = sadd.s32 %s57, 1
      %s59 = scalar_select %p56, %s57, %s58
      %p62 = pneg %p56
      %p63 = scmp.eq.s32.totalorder %s21, 1
      %p64 = por %p62, %p63
      %p65 = scmp.ne.s32.totalorder %s57, %s60
      %p66 = scmp.eq.s32.totalorder %s21, 0
      %p67 = por %p65, %p66
      %p68 = scmp.ne.s32.totalorder %s57, %s60
      %p69 = scmp.eq.s32.totalorder %s26, 1
      %p70 = por %p68, %p69
      %p71 = scmp.ne.s32.totalorder %s60, %s61
      %p72 = scmp.eq.s32.totalorder %s26, 0
      %p73 = por %p71, %p72
      %p74 = scmp.ne.s32.totalorder %s60, %s61
      %p75 = scmp.eq.s32.totalorder %s27, 1
      %p76 = por %p74, %p75
      %p78 = scmp.ne.s32.totalorder %s61, %s77
      %p79 = scmp.eq.s32.totalorder %s27, 0
      %p80 = por %p78, %p79
      %s82 = sadd.s32 %s81, 1
      %p85 = scmp.eq.s32.totalorder %s21, 1
      %p86 = scmp.ne.s32.totalorder %s81, %s83
      %p87 = scmp.eq.s32.totalorder %s21, 0
      %p88 = por %p86, %p87
      %p89 = scmp.ne.s32.totalorder %s81, %s83
      %p90 = scmp.eq.s32.totalorder %s26, 1
      %p91 = por %p89, %p90
      %p92 = scmp.ne.s32.totalorder %s83, %s84
      %p93 = scmp.eq.s32.totalorder %s26, 0
      %p94 = por %p92, %p93
      %p95 = scmp.ne.s32.totalorder %s83, %s84
      %p96 = scmp.eq.s32.totalorder %s27, 1
      %p97 = por %p95, %p96
      %p99 = scmp.ne.s32.totalorder %s84, %s98
      %p100 = scmp.eq.s32.totalorder %s27, 0
      %p101 = por %p99, %p100
      %s103 = sadd.s32 %s102, 1
      %p106 = scmp.eq.s32.totalorder %s21, 1
      %p107 = scmp.ne.s32.totalorder %s102, %s104
      %p108 = scmp.eq.s32.totalorder %s21, 0
      %p109 = por %p107, %p108
      %p110 = scmp.ne.s32.totalorder %s102, %s104
      %p111 = scmp.eq.s32.totalorder %s26, 1
      %p112 = por %p110, %p111
      %p113 = scmp.ne.s32.totalorder %s104, %s105
      %p114 = scmp.eq.s32.totalorder %s26, 0
      %p115 = por %p113, %p114
      %p116 = scmp.ne.s32.totalorder %s104, %s105
      %p117 = scmp.eq.s32.totalorder %s27, 1
      %p118 = por %p116, %p117
      %p120 = scmp.ne.s32.totalorder %s105, %s119
      %p121 = scmp.eq.s32.totalorder %s27, 0
      %p122 = por %p120, %p121
      %s124 = sadd.s32 %s123, 1
      %p127 = scmp.eq.s32.totalorder %s21, 1
      %p128 = scmp.ne.s32.totalorder %s123, %s125
      %p129 = scmp.eq.s32.totalorder %s21, 0
      %p130 = por %p128, %p129
      %p131 = scmp.ne.s32.totalorder %s123, %s125
      %p132 = scmp.eq.s32.totalorder %s26, 1
      %p133 = por %p131, %p132
      %p134 = scmp.ne.s32.totalorder %s125, %s126
      %p135 = scmp.eq.s32.totalorder %s26, 0
      %p136 = por %p134, %p135
      %p137 = scmp.ne.s32.totalorder %s125, %s126
      %p138 = scmp.eq.s32.totalorder %s27, 1
      %p139 = por %p137, %p138
      %p141 = scmp.ne.s32.totalorder %s126, %s140
      %p142 = scmp.eq.s32.totalorder %s27, 0
      %p143 = por %p141, %p142
      %s145 = sadd.s32 %s144, 1
      %p148 = scmp.eq.s32.totalorder %s21, 1
      %p149 = scmp.ne.s32.totalorder %s144, %s146
      %p150 = scmp.eq.s32.totalorder %s21, 0
      %p151 = por %p149, %p150
      %p152 = scmp.ne.s32.totalorder %s144, %s146
      %p153 = scmp.eq.s32.totalorder %s26, 1
      %p154 = por %p152, %p153
      %p155 = scmp.ne.s32.totalorder %s146, %s147
      %p156 = scmp.eq.s32.totalorder %s26, 0
      %p157 = por %p155, %p156
      %p158 = scmp.ne.s32.totalorder %s146, %s147
      %p159 = scmp.eq.s32.totalorder %s27, 1
      %p160 = por %p158, %p159
      %p162 = scmp.ne.s32.totalorder %s147, %s161
      %p163 = scmp.eq.s32.totalorder %s27, 0
      %p164 = por %p162, %p163
      %s166 = sadd.s32 %s165, 1
      %p169 = scmp.eq.s32.totalorder %s21, 1
      %p170 = scmp.ne.s32.totalorder %s165, %s167
      %p171 = scmp.eq.s32.totalorder %s21, 0
      %p172 = por %p170, %p171
      %p173 = scmp.ne.s32.totalorder %s165, %s167
      %p174 = scmp.eq.s32.totalorder %s26, 1
      %p175 = por %p173, %p174
      %p176 = scmp.ne.s32.totalorder %s167, %s168
      %p177 = scmp.eq.s32.totalorder %s26, 0
      %p178 = por %p176, %p177
      %p179 = scmp.ne.s32.totalorder %s167, %s168
      %p180 = scmp.eq.s32.totalorder %s27, 1
      %p181 = por %p179, %p180
      %p183 = scmp.ne.s32.totalorder %s168, %s182
      %p184 = scmp.eq.s32.totalorder %s27, 0
      %p185 = por %p183, %p184
      %s187 = sadd.s32 %s186, 1
      %p190 = scmp.eq.s32.totalorder %s21, 1
      %p191 = scmp.ne.s32.totalorder %s186, %s188
      %p192 = scmp.eq.s32.totalorder %s21, 0
      %p193 = por %p191, %p192
      %p194 = scmp.ne.s32.totalorder %s186, %s188
      %p195 = scmp.eq.s32.totalorder %s26, 1
      %p196 = por %p194, %p195
      %p197 = scmp.ne.s32.totalorder %s188, %s189
      %p198 = scmp.eq.s32.totalorder %s26, 0
      %p199 = por %p197, %p198
      %p200 = scmp.ne.s32.totalorder %s188, %s189
      %p201 = scmp.eq.s32.totalorder %s27, 1
      %p202 = por %p200, %p201
      %p204 = scmp.ne.s32.totalorder %s189, %s203
      %p205 = scmp.eq.s32.totalorder %s27, 0
      %p206 = por %p204, %p205
      %s208 = sadd.s32 %s207, 1
      %p211 = scmp.eq.s32.totalorder %s21, 1
      %p212 = scmp.ne.s32.totalorder %s207, %s209
      %p213 = scmp.eq.s32.totalorder %s21, 0
      %p214 = por %p212, %p213
      %p215 = scmp.ne.s32.totalorder %s207, %s209
      %p216 = scmp.eq.s32.totalorder %s26, 1
      %p217 = por %p215, %p216
      %p218 = scmp.ne.s32.totalorder %s209, %s210
      %p219 = scmp.eq.s32.totalorder %s26, 0
      %p220 = por %p218, %p219
      %p221 = scmp.ne.s32.totalorder %s209, %s210
      %p222 = scmp.eq.s32.totalorder %s27, 1
      %p223 = por %p221, %p222
      %p225 = scmp.ne.s32.totalorder %s210, %s224
      %p226 = scmp.eq.s32.totalorder %s27, 0
      %p227 = por %p225, %p226
      %s228 = ssub.s32 %s21, %s28
      %p229 = scmp.eq.s32.totalorder %s228, 0
      %s231 = sadd.s32 %s230, 1
      %s232 = scalar_select %p229, %s230, %s231
      %p235 = pneg %p229
      %p236 = scmp.eq.s32.totalorder %s21, 1
      %p237 = por %p235, %p236
      %p238 = scmp.ne.s32.totalorder %s230, %s233
      %p239 = scmp.eq.s32.totalorder %s21, 0
      %p240 = por %p238, %p239
      %p241 = scmp.ne.s32.totalorder %s230, %s233
      %p242 = scmp.eq.s32.totalorder %s26, 1
      %p243 = por %p241, %p242
      %p244 = scmp.ne.s32.totalorder %s233, %s234
      %p245 = scmp.eq.s32.totalorder %s26, 0
      %p246 = por %p244, %p245
      %p247 = scmp.ne.s32.totalorder %s233, %s234
      %p248 = scmp.eq.s32.totalorder %s27, 1
      %p249 = por %p247, %p248
      %p251 = scmp.ne.s32.totalorder %s234, %s250
      %p252 = scmp.eq.s32.totalorder %s27, 0
      %p253 = por %p251, %p252
      %p254 = scmp.le.s32.totalorder 1, %s21
      %p255 = scmp.lt.s32.totalorder %s21, 3
      %p256 = pnand %p254, %p255
      %p257 = pneg %p256
      // Predicated region
      $region9: #{tpu_custom_call.1} parent=5 // pred_check
        _
      $region10: #{tpu_custom_call.1} parent=5 // pred_check_branch
        %259 = sbr.rel (%p256) target = $region12
      $region11: #{tpu_custom_call.1} parent=5 // pred_region
        %s260 = ssub.s32 %s21, 1
        // Predicated region
        $region13: #{tpu_custom_call.1} parent=11 // pred_check
          %p261 = pneg %p94
        $region14: #{tpu_custom_call.1} parent=11 // pred_check_branch
          %263 = sbr.rel (%p261) target = $region16
        $region15: #{tpu_custom_call.1} parent=11 // pred_region
          %s265 = ssub.s32 3072, 3072
          %266 = vsyncadd [#allocation4], %s265
          %s267 = sshll.u32 [#allocation3], 4
          %s268 = int_to_ptr.vmem [resolvable:$true] %s267
          %273 = dma.hbm_to_vmem [thread:$0]  %s2, 3072, %s268, [#allocation4], 64, 64, 4
        $region16: #{tpu_custom_call.1} parent=11 // pred_fallthru
          _
        // Predicated region
        $region17: #{tpu_custom_call.1} parent=11 // pred_check
          %p274 = pneg %p115
        $region18: #{tpu_custom_call.1} parent=11 // pred_check_branch
          %276 = sbr.rel (%p274) target = $region20
        $region19: #{tpu_custom_call.1} parent=11 // pred_region
          %s278 = ssub.s32 3072, 3072
          %279 = vsyncadd [#allocation7], %s278
          %s280 = sshll.u32 [#allocation6], 4
          %s281 = int_to_ptr.vmem [resolvable:$true] %s280
          %286 = dma.hbm_to_vmem [thread:$0]  %s3, 3072, %s281, [#allocation7], 64, 64, 4
        $region20: #{tpu_custom_call.1} parent=11 // pred_fallthru
          _
        // Predicated region
        $region21: #{tpu_custom_call.1} parent=11 // pred_check
          %p287 = pneg %p136
        $region22: #{tpu_custom_call.1} parent=11 // pred_check_branch
          %289 = sbr.rel (%p287) target = $region24
        $region23: #{tpu_custom_call.1} parent=11 // pred_region
          _
        $region24: #{tpu_custom_call.1} parent=11 // pred_fallthru
          _
        // Predicated region
        $region25: #{tpu_custom_call.1} parent=11 // pred_check
          %p290 = pneg %p157
        $region26: #{tpu_custom_call.1} parent=11 // pred_check_branch
          %292 = sbr.rel (%p290) target = $region28
        $region27: #{tpu_custom_call.1} parent=11 // pred_region
          %s294 = ssub.s32 1024, 1024
          %295 = vsyncadd [#allocation7], %s294
          %s296 = sshll.u32 [#allocation8], 4
          %s297 = int_to_ptr.vmem [resolvable:$true] %s296
          %302 = dma.hbm_to_vmem [thread:$0]  %s5, 1024, %s297, [#allocation7], 64, 64, 4
        $region28: #{tpu_custom_call.1} parent=11 // pred_fallthru
          _
        // Predicated region
        $region29: #{tpu_custom_call.1} parent=11 // pred_check
          %p303 = pneg %p178
        $region30: #{tpu_custom_call.1} parent=11 // pred_check_branch
          %305 = sbr.rel (%p303) target = $region32
        $region31: #{tpu_custom_call.1} parent=11 // pred_region
          _
        $region32: #{tpu_custom_call.1} parent=11 // pred_fallthru
          _
        // Predicated region
        $region33: #{tpu_custom_call.1} parent=11 // pred_check
          %p306 = pneg %p199
        $region34: #{tpu_custom_call.1} parent=11 // pred_check_branch
          %308 = sbr.rel (%p306) target = $region36
        $region35: #{tpu_custom_call.1} parent=11 // pred_region
          %s310 = ssub.s32 2048, 2048
          %311 = vsyncadd [#allocation10], %s310
          %s312 = sshll.u32 [#allocation9], 4
          %s313 = int_to_ptr.vmem [resolvable:$true] %s312
          %318 = dma.hbm_to_vmem [thread:$0]  %s7, 2048, %s313, [#allocation10], 128, 128, 8
        $region36: #{tpu_custom_call.1} parent=11 // pred_fallthru
          _
        // Predicated region
        $region37: #{tpu_custom_call.1} parent=11 // pred_check
          %p319 = pneg %p220
        $region38: #{tpu_custom_call.1} parent=11 // pred_check_branch
          %321 = sbr.rel (%p319) target = $region40
        $region39: #{tpu_custom_call.1} parent=11 // pred_region
          %s323 = ssub.s32 2048, 2048
          %324 = vsyncadd [#allocation10], %s323
          %s325 = sshll.u32 [#allocation11], 4
          %s326 = int_to_ptr.vmem [resolvable:$true] %s325
          %331 = dma.hbm_to_vmem [thread:$0]  %s8, 2048, %s326, [#allocation10], 128, 128, 8
        $region40: #{tpu_custom_call.1} parent=11 // pred_fallthru
          _
      $region12: #{tpu_custom_call.1} parent=5 // pred_fallthru
        _
      %p332 = scmp.lt.s32.totalorder %s21, 2
      // Predicated region
      $region41: #{tpu_custom_call.1} parent=5 // pred_check
        %p333 = pneg %p332
      $region42: #{tpu_custom_call.1} parent=5 // pred_check_branch
        %335 = sbr.rel (%p333) target = $region44
      $region43: #{tpu_custom_call.1} parent=5 // pred_region
        // Predicated region
        $region45: #{tpu_custom_call.1} parent=43 // pred_check
          %p336 = pneg %p41
        $region46: #{tpu_custom_call.1} parent=43 // pred_check_branch
          %338 = sbr.rel (%p336) target = $region48
        $region47: #{tpu_custom_call.1} parent=43 // pred_region
          %p339 = scmp.lt.s32.totalorder %s21, 1
          %s340 = scalar_select %p339, %s21, 1
          %s341 = smul.addr %s340, 3
          %s342 = smul.addr %s341, 8
          %s343 = scalar_lea.vmem %s0, %s342
        $region48: #{tpu_custom_call.1} parent=43 // pred_fallthru
          _
        // Predicated region
        $region49: #{tpu_custom_call.1} parent=43 // pred_check
          %p344 = pneg %p67
        $region50: #{tpu_custom_call.1} parent=43 // pred_check_branch
          %346 = sbr.rel (%p344) target = $region52
        $region51: #{tpu_custom_call.1} parent=43 // pred_region
          %p347 = scmp.lt.s32.totalorder %s21, 1
          %s348 = scalar_select %p347, %s21, 1
          %s349 = scalar_lea.vmem %s1, %s348
        $region52: #{tpu_custom_call.1} parent=43 // pred_fallthru
          _
      $region44: #{tpu_custom_call.1} parent=5 // pred_fallthru
        _
      %p350 = scmp.le.s32.totalorder 1, %s21
      %p351 = scmp.lt.s32.totalorder %s21, 3
      %p352 = pnand %p350, %p351
      %p353 = pneg %p352
      // Predicated region
      $region53: #{tpu_custom_call.1} parent=5 // pred_check
        _
      $region54: #{tpu_custom_call.1} parent=5 // pred_check_branch
        %355 = sbr.rel (%p352) target = $region56
      $region55: #{tpu_custom_call.1} parent=5 // pred_region
        %s356 = ssub.s32 %s21, 1
        // Predicated region
        $region57: #{tpu_custom_call.1} parent=55 // pred_check
          %p357 = pneg %p94
        $region58: #{tpu_custom_call.1} parent=55 // pred_check_branch
          %359 = sbr.rel (%p357) target = $region60
        $region59: #{tpu_custom_call.1} parent=55 // pred_region
          %360 = dma.done [#allocation4], 3072
        $region60: #{tpu_custom_call.1} parent=55 // pred_fallthru
          _
        // Predicated region
        $region61: #{tpu_custom_call.1} parent=55 // pred_check
          %p361 = pneg %p115
        $region62: #{tpu_custom_call.1} parent=55 // pred_check_branch
          %363 = sbr.rel (%p361) target = $region64
        $region63: #{tpu_custom_call.1} parent=55 // pred_region
          %364 = dma.done [#allocation7], 3072
        $region64: #{tpu_custom_call.1} parent=55 // pred_fallthru
          _
        // Predicated region
        $region65: #{tpu_custom_call.1} parent=55 // pred_check
          %p365 = pneg %p157
        $region66: #{tpu_custom_call.1} parent=55 // pred_check_branch
          %367 = sbr.rel (%p365) target = $region68
        $region67: #{tpu_custom_call.1} parent=55 // pred_region
          %368 = dma.done [#allocation7], 1024
        $region68: #{tpu_custom_call.1} parent=55 // pred_fallthru
          _
        // Predicated region
        $region69: #{tpu_custom_call.1} parent=55 // pred_check
          %p369 = pneg %p199
        $region70: #{tpu_custom_call.1} parent=55 // pred_check_branch
          %371 = sbr.rel (%p369) target = $region72
        $region71: #{tpu_custom_call.1} parent=55 // pred_region
          %372 = dma.done [#allocation10], 2048
        $region72: #{tpu_custom_call.1} parent=55 // pred_fallthru
          _
        // Predicated region
        $region73: #{tpu_custom_call.1} parent=55 // pred_check
          %p373 = pneg %p220
        $region74: #{tpu_custom_call.1} parent=55 // pred_check_branch
          %375 = sbr.rel (%p373) target = $region76
        $region75: #{tpu_custom_call.1} parent=55 // pred_region
          %376 = dma.done [#allocation10], 2048
        $region76: #{tpu_custom_call.1} parent=55 // pred_fallthru
          _
        %p377 = scmp.lt.s32.totalorder %s26, 1
        %s378 = scalar_select %p377, %s26, 1
        %s379 = smul.addr %s378, 3
        %s380 = smul.addr %s379, 8
        %s381 = scalar_lea.vmem %s0, %s380
        %p382 = pneg %p47
        %p383 = pneg %p44
        %p384 = scmp.lt.s32.totalorder %s26, 1
        %s385 = scalar_select %p384, %s26, 1
        %s386 = scalar_lea.vmem %s1, %s385
        %p387 = pneg %p73
        %p388 = pneg %p70
        %p389 = pneg %p94
        %p390 = pneg %p91
        %p391 = pneg %p115
        %p392 = pneg %p112
        %p393 = pneg %p136
        %p394 = pneg %p133
        %p395 = pneg %p157
        %p396 = pneg %p154
        %p397 = pneg %p178
        %p398 = pneg %p175
        %p399 = pneg %p199
        %p400 = pneg %p196
        %p401 = pneg %p220
        %p402 = pneg %p217
        %p403 = pneg %p246
        %p404 = pneg %p243
        %s405 = sand.u32 %s233, 1
        %s406 = scalar_lea.sflag [#allocation5], %s405
        %s407 = sand.u32 %s233, 1
        %s408 = smul.addr %s407, 16
        %s409 = scalar_lea.vmem [#allocation12], %s408
        %p410 = scmp.lt.s32.totalorder %s26, 1
        %s411 = scalar_select %p410, %s26, 1
        %s412 = smul.addr %s411, 3
        %s413 = smul.addr %s412, 8
        %s414 = scalar_lea.vmem %s0, %s413
        %p415 = scmp.lt.s32.totalorder %s26, 1
        %s416 = scalar_select %p415, %s26, 1
        %s417 = scalar_lea.vmem %s1, %s416
        %v419 = vld [vmem:[%s6] sm:$0xff]
        %v420 = vld [vmem:[#allocation9] sm:$0xff]
        %v421 = vld [vmem:[#allocation9 + $0x8] sm:$0xff]
        %v422 = vld [vmem:[#allocation9 + $0x10] sm:$0xff]
        %v423 = vld [vmem:[#allocation9 + $0x18] sm:$0xff]
        %v424 = vld [vmem:[#allocation9 + $0x20] sm:$0xff]
        %v425 = vld [vmem:[#allocation9 + $0x28] sm:$0xff]
        %v426 = vld [vmem:[#allocation9 + $0x30] sm:$0xff]
        %v427 = vld [vmem:[#allocation9 + $0x38] sm:$0xff]
        %v428 = vld [vmem:[#allocation9 + $0x40] sm:$0xff]
        %v429 = vld [vmem:[#allocation9 + $0x48] sm:$0xff]
        %v430 = vld [vmem:[#allocation9 + $0x50] sm:$0xff]
        %v431 = vld [vmem:[#allocation9 + $0x58] sm:$0xff]
        %v432 = vld [vmem:[#allocation9 + $0x60] sm:$0xff]
        %v433 = vld [vmem:[#allocation9 + $0x68] sm:$0xff]
        %v434 = vld [vmem:[#allocation9 + $0x70] sm:$0xff]
        %v435 = vld [vmem:[#allocation9 + $0x78] sm:$0xff]
        %v436 = vld [vmem:[#allocation11] sm:$0xff]
        %v437 = vld [vmem:[#allocation11 + $0x8] sm:$0xff]
        %v438 = vld [vmem:[#allocation11 + $0x10] sm:$0xff]
        %v439 = vld [vmem:[#allocation11 + $0x18] sm:$0xff]
        %v440 = vld [vmem:[#allocation11 + $0x20] sm:$0xff]
        %v441 = vld [vmem:[#allocation11 + $0x28] sm:$0xff]
        %v442 = vld [vmem:[#allocation11 + $0x30] sm:$0xff]
        %v443 = vld [vmem:[#allocation11 + $0x38] sm:$0xff]
        %v444 = vld [vmem:[#allocation11 + $0x40] sm:$0xff]
        %v445 = vld [vmem:[#allocation11 + $0x48] sm:$0xff]
        %v446 = vld [vmem:[#allocation11 + $0x50] sm:$0xff]
        %v447 = vld [vmem:[#allocation11 + $0x58] sm:$0xff]
        %v448 = vld [vmem:[#allocation11 + $0x60] sm:$0xff]
        %v449 = vld [vmem:[#allocation11 + $0x68] sm:$0xff]
        %v450 = vld [vmem:[#allocation11 + $0x70] sm:$0xff]
        %v451 = vld [vmem:[#allocation11 + $0x78] sm:$0xff]
        %v452 = vld [vmem:[%s414] sm:$0xff]
        %v453 = vld [vmem:[%s414 + $0x8] sm:$0xff]
        %v454 = vpack.c.bf16 %v453, %v452
        %v455 = vld [vmem:[#allocation3] sm:$0xf]
        %v456 = vld [vmem:[#allocation3 + $0x4] sm:$0xf]
        %v457 = vld [vmem:[#allocation3 + $0x8] sm:$0xf]
        %v458 = vld [vmem:[#allocation3 + $0xc] sm:$0xf]
        %v459 = vld [vmem:[#allocation3 + $0x10] sm:$0xf]
        %v460 = vld [vmem:[#allocation3 + $0x14] sm:$0xf]
        %v461 = vld [vmem:[#allocation3 + $0x18] sm:$0xf]
        %v462 = vld [vmem:[#allocation3 + $0x1c] sm:$0xf]
        %v463 = vld [vmem:[#allocation3 + $0x20] sm:$0xf]
        %v464 = vld [vmem:[#allocation3 + $0x24] sm:$0xf]
        %v465 = vld [vmem:[#allocation3 + $0x28] sm:$0xf]
        %v466 = vld [vmem:[#allocation3 + $0x2c] sm:$0xf]
        %v467 = vld [vmem:[#allocation3 + $0x30] sm:$0xf]
        %v468 = vld [vmem:[#allocation3 + $0x34] sm:$0xf]
        %v469 = vld [vmem:[#allocation3 + $0x38] sm:$0xf]
        %v470 = vld [vmem:[#allocation3 + $0x3c] sm:$0xf]
        %v471 = vld [vmem:[%s414 + $0x1] sm:$0xff]
        %v472 = vld [vmem:[%s414 + $0x9] sm:$0xff]
        %v473 = vpack.c.bf16 %v472, %v471
        %s474 = scalar_lea.vmem [#allocation3], 64
        %v475 = vld [vmem:[%s474] sm:$0xf]
        %v476 = vld [vmem:[%s474 + $0x4] sm:$0xf]
        %v477 = vld [vmem:[%s474 + $0x8] sm:$0xf]
        %v478 = vld [vmem:[%s474 + $0xc] sm:$0xf]
        %v479 = vld [vmem:[%s474 + $0x10] sm:$0xf]
        %v480 = vld [vmem:[%s474 + $0x14] sm:$0xf]
        %v481 = vld [vmem:[%s474 + $0x18] sm:$0xf]
        %v482 = vld [vmem:[%s474 + $0x1c] sm:$0xf]
        %v483 = vld [vmem:[%s474 + $0x20] sm:$0xf]
        %v484 = vld [vmem:[%s474 + $0x24] sm:$0xf]
        %v485 = vld [vmem:[%s474 + $0x28] sm:$0xf]
        %v486 = vld [vmem:[%s474 + $0x2c] sm:$0xf]
        %v487 = vld [vmem:[%s474 + $0x30] sm:$0xf]
        %v488 = vld [vmem:[%s474 + $0x34] sm:$0xf]
        %v489 = vld [vmem:[%s474 + $0x38] sm:$0xf]
        %v490 = vld [vmem:[%s474 + $0x3c] sm:$0xf]
        %v507 = vunpack.c.l.b16 %v475
        %v508 = vunpack.c.l.b16 %v476
        %v509 = vunpack.c.l.b16 %v477
        %v510 = vunpack.c.l.b16 %v478
        %v511 = vunpack.c.l.b16 %v479
        %v512 = vunpack.c.l.b16 %v480
        %v513 = vunpack.c.l.b16 %v481
        %v514 = vunpack.c.l.b16 %v482
        %v515 = vunpack.c.l.b16 %v483
        %v516 = vunpack.c.l.b16 %v484
        %v517 = vunpack.c.l.b16 %v485
        %v518 = vunpack.c.l.b16 %v486
        %v519 = vunpack.c.l.b16 %v487
        %v520 = vunpack.c.l.b16 %v488
        %v521 = vunpack.c.l.b16 %v489
        %v522 = vunpack.c.l.b16 %v490
        %v523 = vpack.c.b16 %v508, %v507
        %v524 = vpack.c.b16 %v510, %v509
        %v525 = vpack.c.b16 %v512, %v511
        %v526 = vpack.c.b16 %v514, %v513
        %v527 = vpack.c.b16 %v516, %v515
        %v528 = vpack.c.b16 %v518, %v517
        %v529 = vpack.c.b16 %v520, %v519
        %v530 = vpack.c.b16 %v522, %v521
        %539 = vmatprep.subr.bf16.mxu0 0
        %540 = vmatpush1.bf16.msra.mxu0 %v530
        %541 = vmatprep.subr.bf16.mxu0 0
        %542 = vmatpush1.bf16.msra.mxu0 %v529
        %543 = vmatprep.subr.bf16.mxu0 0
        %544 = vmatpush1.bf16.msra.mxu0 %v528
        %545 = vmatprep.subr.bf16.mxu0 0
        %546 = vmatpush1.bf16.msra.mxu0 %v527
        %547 = vmatprep.subr.bf16.mxu0 0
        %548 = vmatpush1.bf16.msra.mxu0 %v526
        %549 = vmatprep.subr.bf16.mxu0 0
        %550 = vmatpush1.bf16.msra.mxu0 %v525
        %551 = vmatprep.subr.bf16.mxu0 0
        %552 = vmatpush1.bf16.msra.mxu0 %v524
        %553 = vmatprep.subr.bf16.mxu0 0
        %554 = vmatpush1.bf16.msra.mxu0 %v523
        %555 = vmatprep.subr.bf16.mxu0 0
        %556 = vmatpush2.bf16.msra.mxu0 0
        %557 = vmatprep.subr.bf16.mxu0 0
        %558 = vmatpush2.bf16.msra.mxu0 0
        %559 = vmatprep.subr.bf16.mxu0 0
        %560 = vmatpush2.bf16.msra.mxu0 0
        %561 = vmatprep.subr.bf16.mxu0 0
        %562 = vmatpush2.bf16.msra.mxu0 0
        %563 = vmatprep.subr.bf16.mxu0 0
        %564 = vmatpush2.bf16.msra.mxu0 0
        %565 = vmatprep.subr.bf16.mxu0 0
        %566 = vmatpush2.bf16.msra.mxu0 0
        %567 = vmatprep.subr.bf16.mxu0 0
        %568 = vmatpush2.bf16.msra.mxu0 0
        %569 = vmatprep.subr.bf16.mxu0 0
        %570 = vmatpush2.bf16.msra.mxu0 0
        %571 = vmatprep.mubr.bf16.mxu0 0
        %572 = vmatmul.mubr.bf16.gmra.mxu0 %v473
        %v573 = vpop.f32.mrf.mxu0
        %v574 = vadd.f32 0.0, %v573
        %v575 = vpop.f32.mrf.mxu0
        %v576 = vpop.f32.mrf.mxu0
        %v577 = vadd.f32 0.0, %v576
        %v578 = vpop.f32.mrf.mxu0
        %579 = vdwg.mxu0
        %v596 = vunpack.c.l.b16 %v455
        %v597 = vunpack.c.l.b16 %v456
        %v598 = vunpack.c.l.b16 %v457
        %v599 = vunpack.c.l.b16 %v458
        %v600 = vunpack.c.l.b16 %v459
        %v601 = vunpack.c.l.b16 %v460
        %v602 = vunpack.c.l.b16 %v461
        %v603 = vunpack.c.l.b16 %v462
        %v604 = vunpack.c.l.b16 %v463
        %v605 = vunpack.c.l.b16 %v464
        %v606 = vunpack.c.l.b16 %v465
        %v607 = vunpack.c.l.b16 %v466
        %v608 = vunpack.c.l.b16 %v467
        %v609 = vunpack.c.l.b16 %v468
        %v610 = vunpack.c.l.b16 %v469
        %v611 = vunpack.c.l.b16 %v470
        %v612 = vpack.c.b16 %v597, %v596
        %v613 = vpack.c.b16 %v599, %v598
        %v614 = vpack.c.b16 %v601, %v600
        %v615 = vpack.c.b16 %v603, %v602
        %v616 = vpack.c.b16 %v605, %v604
        %v617 = vpack.c.b16 %v607, %v606
        %v618 = vpack.c.b16 %v609, %v608
        %v619 = vpack.c.b16 %v611, %v610
        %628 = vmatprep.subr.bf16.mxu0 0
        %629 = vmatpush1.bf16.msra.mxu0 %v619
        %630 = vmatprep.subr.bf16.mxu0 0
        %631 = vmatpush1.bf16.msra.mxu0 %v618
        %632 = vmatprep.subr.bf16.mxu0 0
        %633 = vmatpush1.bf16.msra.mxu0 %v617
        %634 = vmatprep.subr.bf16.mxu0 0
        %635 = vmatpush1.bf16.msra.mxu0 %v616
        %636 = vmatprep.subr.bf16.mxu0 0
        %637 = vmatpush1.bf16.msra.mxu0 %v615
        %638 = vmatprep.subr.bf16.mxu0 0
        %639 = vmatpush1.bf16.msra.mxu0 %v614
        %640 = vmatprep.subr.bf16.mxu0 0
        %641 = vmatpush1.bf16.msra.mxu0 %v613
        %642 = vmatprep.subr.bf16.mxu0 0
        %643 = vmatpush1.bf16.msra.mxu0 %v612
        %644 = vmatprep.subr.bf16.mxu0 0
        %645 = vmatpush2.bf16.msra.mxu0 0
        %646 = vmatprep.subr.bf16.mxu0 0
        %647 = vmatpush2.bf16.msra.mxu0 0
        %648 = vmatprep.subr.bf16.mxu0 0
        %649 = vmatpush2.bf16.msra.mxu0 0
        %650 = vmatprep.subr.bf16.mxu0 0
        %651 = vmatpush2.bf16.msra.mxu0 0
        %652 = vmatprep.subr.bf16.mxu0 0
        %653 = vmatpush2.bf16.msra.mxu0 0
        %654 = vmatprep.subr.bf16.mxu0 0
        %655 = vmatpush2.bf16.msra.mxu0 0
        %656 = vmatprep.subr.bf16.mxu0 0
        %657 = vmatpush2.bf16.msra.mxu0 0
        %658 = vmatprep.subr.bf16.mxu0 0
        %659 = vmatpush2.bf16.msra.mxu0 0
        %660 = vmatprep.mubr.bf16.mxu0 0
        %661 = vmatmul.mubr.bf16.gmra.mxu0 %v454
        %v662 = vpop.f32.mrf.mxu0
        %v663 = vadd.f32 %v574, %v662
        %v664 = vpop.f32.mrf.mxu0
        %v665 = vpop.f32.mrf.mxu0
        %v666 = vadd.f32 %v577, %v665
        %v667 = vpop.f32.mrf.mxu0
        %668 = vdwg.mxu0
        %v669 = vld [vmem:[%s414 + $0x2] sm:$0xff]
        %v670 = vld [vmem:[%s414 + $0xa] sm:$0xff]
        %v671 = vpack.c.bf16 %v670, %v669
        %s672 = scalar_lea.vmem [#allocation3], 128
        %v673 = vld [vmem:[%s672] sm:$0xf]
        %v674 = vld [vmem:[%s672 + $0x4] sm:$0xf]
        %v675 = vld [vmem:[%s672 + $0x8] sm:$0xf]
        %v676 = vld [vmem:[%s672 + $0xc] sm:$0xf]
        %v677 = vld [vmem:[%s672 + $0x10] sm:$0xf]
        %v678 = vld [vmem:[%s672 + $0x14] sm:$0xf]
        %v679 = vld [vmem:[%s672 + $0x18] sm:$0xf]
        %v680 = vld [vmem:[%s672 + $0x1c] sm:$0xf]
        %v681 = vld [vmem:[%s672 + $0x20] sm:$0xf]
        %v682 = vld [vmem:[%s672 + $0x24] sm:$0xf]
        %v683 = vld [vmem:[%s672 + $0x28] sm:$0xf]
        %v684 = vld [vmem:[%s672 + $0x2c] sm:$0xf]
        %v685 = vld [vmem:[%s672 + $0x30] sm:$0xf]
        %v686 = vld [vmem:[%s672 + $0x34] sm:$0xf]
        %v687 = vld [vmem:[%s672 + $0x38] sm:$0xf]
        %v688 = vld [vmem:[%s672 + $0x3c] sm:$0xf]
        %v705 = vunpack.c.l.b16 %v673
        %v706 = vunpack.c.l.b16 %v674
        %v707 = vunpack.c.l.b16 %v675
        %v708 = vunpack.c.l.b16 %v676
        %v709 = vunpack.c.l.b16 %v677
        %v710 = vunpack.c.l.b16 %v678
        %v711 = vunpack.c.l.b16 %v679
        %v712 = vunpack.c.l.b16 %v680
        %v713 = vunpack.c.l.b16 %v681
        %v714 = vunpack.c.l.b16 %v682
        %v715 = vunpack.c.l.b16 %v683
        %v716 = vunpack.c.l.b16 %v684
        %v717 = vunpack.c.l.b16 %v685
        %v718 = vunpack.c.l.b16 %v686
        %v719 = vunpack.c.l.b16 %v687
        %v720 = vunpack.c.l.b16 %v688
        %v721 = vpack.c.b16 %v706, %v705
        %v722 = vpack.c.b16 %v708, %v707
        %v723 = vpack.c.b16 %v710, %v709
        %v724 = vpack.c.b16 %v712, %v711
        %v725 = vpack.c.b16 %v714, %v713
        %v726 = vpack.c.b16 %v716, %v715
        %v727 = vpack.c.b16 %v718, %v717
        %v728 = vpack.c.b16 %v720, %v719
        %737 = vmatprep.subr.bf16.mxu0 0
        %738 = vmatpush1.bf16.msra.mxu0 %v728
        %739 = vmatprep.subr.bf16.mxu0 0
        %740 = vmatpush1.bf16.msra.mxu0 %v727
        %741 = vmatprep.subr.bf16.mxu0 0
        %742 = vmatpush1.bf16.msra.mxu0 %v726
        %743 = vmatprep.subr.bf16.mxu0 0
        %744 = vmatpush1.bf16.msra.mxu0 %v725
        %745 = vmatprep.subr.bf16.mxu0 0
        %746 = vmatpush1.bf16.msra.mxu0 %v724
        %747 = vmatprep.subr.bf16.mxu0 0
        %748 = vmatpush1.bf16.msra.mxu0 %v723
        %749 = vmatprep.subr.bf16.mxu0 0
        %750 = vmatpush1.bf16.msra.mxu0 %v722
        %751 = vmatprep.subr.bf16.mxu0 0
        %752 = vmatpush1.bf16.msra.mxu0 %v721
        %753 = vmatprep.subr.bf16.mxu0 0
        %754 = vmatpush2.bf16.msra.mxu0 0
        %755 = vmatprep.subr.bf16.mxu0 0
        %756 = vmatpush2.bf16.msra.mxu0 0
        %757 = vmatprep.subr.bf16.mxu0 0
        %758 = vmatpush2.bf16.msra.mxu0 0
        %759 = vmatprep.subr.bf16.mxu0 0
        %760 = vmatpush2.bf16.msra.mxu0 0
        %761 = vmatprep.subr.bf16.mxu0 0
        %762 = vmatpush2.bf16.msra.mxu0 0
        %763 = vmatprep.subr.bf16.mxu0 0
        %764 = vmatpush2.bf16.msra.mxu0 0
        %765 = vmatprep.subr.bf16.mxu0 0
        %766 = vmatpush2.bf16.msra.mxu0 0
        %767 = vmatprep.subr.bf16.mxu0 0
        %768 = vmatpush2.bf16.msra.mxu0 0
        %769 = vmatprep.mubr.bf16.mxu0 0
        %770 = vmatmul.mubr.bf16.gmra.mxu0 %v671
        %v771 = vpop.f32.mrf.mxu0
        %v772 = vadd.f32 0.0, %v771
        %v773 = vpop.f32.mrf.mxu0
        %v774 = vpop.f32.mrf.mxu0
        %v775 = vadd.f32 0.0, %v774
        %v776 = vpop.f32.mrf.mxu0
        %777 = vdwg.mxu0
        %v778 = vadd.f32 %v663, %v772
        %v779 = vadd.f32 %v666, %v775
        %v780 = vlaneseq
        %v781 = vshrl.u32 %v780, 7
        %v782 = vsub.s32 0, %v781
        %v783 = vrot.slane %v419, %v782
        %v784 = vadd.f32 %v778, %v783
        %v785 = vadd.f32 %v779, %v783
        %v786 = vadd.f32 %v784, %v785
        %v787 = vrot.slane %v786, 4
        %v788 = vadd.f32 %v786, %v787
        %v789 = vrot.slane %v788, 2
        %v790 = vadd.f32 %v788, %v789
        %v791 = vrot.slane %v790, 1
        %v792 = vadd.f32 %v790, %v791
        %793 = vmatprep.subr.mxu0 0.0
        %794 = vmatpush1.msra.mxu0 %v435
        %795 = vmatprep.subr.mxu0 0.0
        %796 = vmatpush1.msra.mxu0 %v434
        %797 = vmatprep.subr.mxu0 0.0
        %798 = vmatpush1.msra.mxu0 %v433
        %799 = vmatprep.subr.mxu0 0.0
        %800 = vmatpush1.msra.mxu0 %v432
        %801 = vmatprep.subr.mxu0 0.0
        %802 = vmatpush1.msra.mxu0 %v431
        %803 = vmatprep.subr.mxu0 0.0
        %804 = vmatpush1.msra.mxu0 %v430
        %805 = vmatprep.subr.mxu0 0.0
        %806 = vmatpush1.msra.mxu0 %v429
        %807 = vmatprep.subr.mxu0 0.0
        %808 = vmatpush1.msra.mxu0 %v428
        %809 = vmatprep.subr.mxu0 0.0
        %810 = vmatpush1.msra.mxu0 %v427
        %811 = vmatprep.subr.mxu0 0.0
        %812 = vmatpush1.msra.mxu0 %v426
        %813 = vmatprep.subr.mxu0 0.0
        %814 = vmatpush1.msra.mxu0 %v425
        %815 = vmatprep.subr.mxu0 0.0
        %816 = vmatpush1.msra.mxu0 %v424
        %817 = vmatprep.subr.mxu0 0.0
        %818 = vmatpush1.msra.mxu0 %v423
        %819 = vmatprep.subr.mxu0 0.0
        %820 = vmatpush1.msra.mxu0 %v422
        %821 = vmatprep.subr.mxu0 0.0
        %822 = vmatpush1.msra.mxu0 %v421
        %823 = vmatprep.subr.mxu0 0.0
        %824 = vmatpush1.msra.mxu0 %v420
        %825 = vmatprep.subr.mxu0 0.0
        %826 = vmatpush2.msra.mxu0 0.0
        %827 = vmatprep.subr.mxu0 0.0
        %828 = vmatpush2.msra.mxu0 0.0
        %829 = vmatprep.subr.mxu0 0.0
        %830 = vmatpush2.msra.mxu0 0.0
        %831 = vmatprep.subr.mxu0 0.0
        %832 = vmatpush2.msra.mxu0 0.0
        %833 = vmatprep.subr.mxu0 0.0
        %834 = vmatpush2.msra.mxu0 0.0
        %835 = vmatprep.subr.mxu0 0.0
        %836 = vmatpush2.msra.mxu0 0.0
        %837 = vmatprep.subr.mxu0 0.0
        %838 = vmatpush2.msra.mxu0 0.0
        %839 = vmatprep.subr.mxu0 0.0
        %840 = vmatpush2.msra.mxu0 0.0
        %841 = vmatprep.subr.mxu0 0.0
        %842 = vmatpush2.msra.mxu0 0.0
        %843 = vmatprep.subr.mxu0 0.0
        %844 = vmatpush2.msra.mxu0 0.0
        %845 = vmatprep.subr.mxu0 0.0
        %846 = vmatpush2.msra.mxu0 0.0
        %847 = vmatprep.subr.mxu0 0.0
        %848 = vmatpush2.msra.mxu0 0.0
        %849 = vmatprep.subr.mxu0 0.0
        %850 = vmatpush2.msra.mxu0 0.0
        %851 = vmatprep.subr.mxu0 0.0
        %852 = vmatpush2.msra.mxu0 0.0
        %853 = vmatprep.subr.mxu0 0.0
        %854 = vmatpush2.msra.mxu0 0.0
        %855 = vmatprep.subr.mxu0 0.0
        %856 = vmatpush2.msra.mxu0 0.0
        %857 = vmatprep.mubr.f32.mxu0 0.0
        %858 = vmatmul.mubr.f32.gmra.mxu0 %v792
        %v859 = vpop.f32.mrf.mxu0
        %v860 = vadd.f32 0.0, %v859
        %v861 = vpop.f32.mrf.mxu0
        %862 = vdwg.mxu0
        %v863 = vmul.f32 %v860, 0.015625
        %864 = vmatprep.subr.mxu0 0.0
        %865 = vmatpush1.msra.mxu0 %v451
        %866 = vmatprep.subr.mxu0 0.0
        %867 = vmatpush1.msra.mxu0 %v450
        %868 = vmatprep.subr.mxu0 0.0
        %869 = vmatpush1.msra.mxu0 %v449
        %870 = vmatprep.subr.mxu0 0.0
        %871 = vmatpush1.msra.mxu0 %v448
        %872 = vmatprep.subr.mxu0 0.0
        %873 = vmatpush1.msra.mxu0 %v447
        %874 = vmatprep.subr.mxu0 0.0
        %875 = vmatpush1.msra.mxu0 %v446
        %876 = vmatprep.subr.mxu0 0.0
        %877 = vmatpush1.msra.mxu0 %v445
        %878 = vmatprep.subr.mxu0 0.0
        %879 = vmatpush1.msra.mxu0 %v444
        %880 = vmatprep.subr.mxu0 0.0
        %881 = vmatpush1.msra.mxu0 %v443
        %882 = vmatprep.subr.mxu0 0.0
        %883 = vmatpush1.msra.mxu0 %v442
        %884 = vmatprep.subr.mxu0 0.0
        %885 = vmatpush1.msra.mxu0 %v441
        %886 = vmatprep.subr.mxu0 0.0
        %887 = vmatpush1.msra.mxu0 %v440
        %888 = vmatprep.subr.mxu0 0.0
        %889 = vmatpush1.msra.mxu0 %v439
        %890 = vmatprep.subr.mxu0 0.0
        %891 = vmatpush1.msra.mxu0 %v438
        %892 = vmatprep.subr.mxu0 0.0
        %893 = vmatpush1.msra.mxu0 %v437
        %894 = vmatprep.subr.mxu0 0.0
        %895 = vmatpush1.msra.mxu0 %v436
        %896 = vmatprep.subr.mxu0 0.0
        %897 = vmatpush2.msra.mxu0 0.0
        %898 = vmatprep.subr.mxu0 0.0
        %899 = vmatpush2.msra.mxu0 0.0
        %900 = vmatprep.subr.mxu0 0.0
        %901 = vmatpush2.msra.mxu0 0.0
        %902 = vmatprep.subr.mxu0 0.0
        %903 = vmatpush2.msra.mxu0 0.0
        %904 = vmatprep.subr.mxu0 0.0
        %905 = vmatpush2.msra.mxu0 0.0
        %906 = vmatprep.subr.mxu0 0.0
        %907 = vmatpush2.msra.mxu0 0.0
        %908 = vmatprep.subr.mxu0 0.0
        %909 = vmatpush2.msra.mxu0 0.0
        %910 = vmatprep.subr.mxu0 0.0
        %911 = vmatpush2.msra.mxu0 0.0
        %912 = vmatprep.subr.mxu0 0.0
        %913 = vmatpush2.msra.mxu0 0.0
        %914 = vmatprep.subr.mxu0 0.0
        %915 = vmatpush2.msra.mxu0 0.0
        %916 = vmatprep.subr.mxu0 0.0
        %917 = vmatpush2.msra.mxu0 0.0
        %918 = vmatprep.subr.mxu0 0.0
        %919 = vmatpush2.msra.mxu0 0.0
        %920 = vmatprep.subr.mxu0 0.0
        %921 = vmatpush2.msra.mxu0 0.0
        %922 = vmatprep.subr.mxu0 0.0
        %923 = vmatpush2.msra.mxu0 0.0
        %924 = vmatprep.subr.mxu0 0.0
        %925 = vmatpush2.msra.mxu0 0.0
        %926 = vmatprep.subr.mxu0 0.0
        %927 = vmatpush2.msra.mxu0 0.0
        %928 = vmatprep.mubr.f32.mxu0 0.0
        %929 = vmatmul.mubr.f32.gmra.mxu0 %v863
        %v930 = vpop.f32.mrf.mxu0
        %v931 = vadd.f32 0.0, %v930
        %v932 = vpop.f32.mrf.mxu0
        %933 = vdwg.mxu0
        %v934 = vlaneseq
        %v935 = vshrl.u32 %v934, 7
        %v936 = vsub.s32 0, %v935
        %v937 = vrot.slane %v931, %v936
        %v938 = vsub.f32 %v784, %v937
        %v939 = vsub.f32 %v785, %v937
        %v940 = vmul.f32 %v938, %v938
        %v941 = vmul.f32 %v939, %v939
        %v942 = vadd.f32 %v940, %v941
        %v943 = vrot.slane %v942, 4
        %v944 = vadd.f32 %v942, %v943
        %v945 = vrot.slane %v944, 2
        %v946 = vadd.f32 %v944, %v945
        %v947 = vrot.slane %v946, 1
        %v948 = vadd.f32 %v946, %v947
        %949 = vmatprep.subr.mxu0 0.0
        %950 = vmatpush1.msra.mxu0 %v435
        %951 = vmatprep.subr.mxu0 0.0
        %952 = vmatpush1.msra.mxu0 %v434
        %953 = vmatprep.subr.mxu0 0.0
        %954 = vmatpush1.msra.mxu0 %v433
        %955 = vmatprep.subr.mxu0 0.0
        %956 = vmatpush1.msra.mxu0 %v432
        %957 = vmatprep.subr.mxu0 0.0
        %958 = vmatpush1.msra.mxu0 %v431
        %959 = vmatprep.subr.mxu0 0.0
        %960 = vmatpush1.msra.mxu0 %v430
        %961 = vmatprep.subr.mxu0 0.0
        %962 = vmatpush1.msra.mxu0 %v429
        %963 = vmatprep.subr.mxu0 0.0
        %964 = vmatpush1.msra.mxu0 %v428
        %965 = vmatprep.subr.mxu0 0.0
        %966 = vmatpush1.msra.mxu0 %v427
        %967 = vmatprep.subr.mxu0 0.0
        %968 = vmatpush1.msra.mxu0 %v426
        %969 = vmatprep.subr.mxu0 0.0
        %970 = vmatpush1.msra.mxu0 %v425
        %971 = vmatprep.subr.mxu0 0.0
        %972 = vmatpush1.msra.mxu0 %v424
        %973 = vmatprep.subr.mxu0 0.0
        %974 = vmatpush1.msra.mxu0 %v423
        %975 = vmatprep.subr.mxu0 0.0
        %976 = vmatpush1.msra.mxu0 %v422
        %977 = vmatprep.subr.mxu0 0.0
        %978 = vmatpush1.msra.mxu0 %v421
        %979 = vmatprep.subr.mxu0 0.0
        %980 = vmatpush1.msra.mxu0 %v420
        %981 = vmatprep.subr.mxu0 0.0
        %982 = vmatpush2.msra.mxu0 0.0
        %983 = vmatprep.subr.mxu0 0.0
        %984 = vmatpush2.msra.mxu0 0.0
        %985 = vmatprep.subr.mxu0 0.0
        %986 = vmatpush2.msra.mxu0 0.0
        %987 = vmatprep.subr.mxu0 0.0
        %988 = vmatpush2.msra.mxu0 0.0
        %989 = vmatprep.subr.mxu0 0.0
        %990 = vmatpush2.msra.mxu0 0.0
        %991 = vmatprep.subr.mxu0 0.0
        %992 = vmatpush2.msra.mxu0 0.0
        %993 = vmatprep.subr.mxu0 0.0
        %994 = vmatpush2.msra.mxu0 0.0
        %995 = vmatprep.subr.mxu0 0.0
        %996 = vmatpush2.msra.mxu0 0.0
        %997 = vmatprep.subr.mxu0 0.0
        %998 = vmatpush2.msra.mxu0 0.0
        %999 = vmatprep.subr.mxu0 0.0
        %1000 = vmatpush2.msra.mxu0 0.0
        %1001 = vmatprep.subr.mxu0 0.0
        %1002 = vmatpush2.msra.mxu0 0.0
        %1003 = vmatprep.subr.mxu0 0.0
        %1004 = vmatpush2.msra.mxu0 0.0
        %1005 = vmatprep.subr.mxu0 0.0
        %1006 = vmatpush2.msra.mxu0 0.0
        %1007 = vmatprep.subr.mxu0 0.0
        %1008 = vmatpush2.msra.mxu0 0.0
        %1009 = vmatprep.subr.mxu0 0.0
        %1010 = vmatpush2.msra.mxu0 0.0
        %1011 = vmatprep.subr.mxu0 0.0
        %1012 = vmatpush2.msra.mxu0 0.0
        %1013 = vmatprep.mubr.f32.mxu0 0.0
        %1014 = vmatmul.mubr.f32.gmra.mxu0 %v948
        %v1015 = vpop.f32.mrf.mxu0
        %v1016 = vadd.f32 0.0, %v1015
        %v1017 = vpop.f32.mrf.mxu0
        %1018 = vdwg.mxu0
        %v1019 = vmul.f32 %v1016, 0.015625
        %1020 = vmatprep.subr.mxu0 0.0
        %1021 = vmatpush1.msra.mxu0 %v451
        %1022 = vmatprep.subr.mxu0 0.0
        %1023 = vmatpush1.msra.mxu0 %v450
        %1024 = vmatprep.subr.mxu0 0.0
        %1025 = vmatpush1.msra.mxu0 %v449
        %1026 = vmatprep.subr.mxu0 0.0
        %1027 = vmatpush1.msra.mxu0 %v448
        %1028 = vmatprep.subr.mxu0 0.0
        %1029 = vmatpush1.msra.mxu0 %v447
        %1030 = vmatprep.subr.mxu0 0.0
        %1031 = vmatpush1.msra.mxu0 %v446
        %1032 = vmatprep.subr.mxu0 0.0
        %1033 = vmatpush1.msra.mxu0 %v445
        %1034 = vmatprep.subr.mxu0 0.0
        %1035 = vmatpush1.msra.mxu0 %v444
        %1036 = vmatprep.subr.mxu0 0.0
        %1037 = vmatpush1.msra.mxu0 %v443
        %1038 = vmatprep.subr.mxu0 0.0
        %1039 = vmatpush1.msra.mxu0 %v442
        %1040 = vmatprep.subr.mxu0 0.0
        %1041 = vmatpush1.msra.mxu0 %v441
        %1042 = vmatprep.subr.mxu0 0.0
        %1043 = vmatpush1.msra.mxu0 %v440
        %1044 = vmatprep.subr.mxu0 0.0
        %1045 = vmatpush1.msra.mxu0 %v439
        %1046 = vmatprep.subr.mxu0 0.0
        %1047 = vmatpush1.msra.mxu0 %v438
        %1048 = vmatprep.subr.mxu0 0.0
        %1049 = vmatpush1.msra.mxu0 %v437
        %1050 = vmatprep.subr.mxu0 0.0
        %1051 = vmatpush1.msra.mxu0 %v436
        %1052 = vmatprep.subr.mxu0 0.0
        %1053 = vmatpush2.msra.mxu0 0.0
        %1054 = vmatprep.subr.mxu0 0.0
        %1055 = vmatpush2.msra.mxu0 0.0
        %1056 = vmatprep.subr.mxu0 0.0
        %1057 = vmatpush2.msra.mxu0 0.0
        %1058 = vmatprep.subr.mxu0 0.0
        %1059 = vmatpush2.msra.mxu0 0.0
        %1060 = vmatprep.subr.mxu0 0.0
        %1061 = vmatpush2.msra.mxu0 0.0
        %1062 = vmatprep.subr.mxu0 0.0
        %1063 = vmatpush2.msra.mxu0 0.0
        %1064 = vmatprep.subr.mxu0 0.0
        %1065 = vmatpush2.msra.mxu0 0.0
        %1066 = vmatprep.subr.mxu0 0.0
        %1067 = vmatpush2.msra.mxu0 0.0
        %1068 = vmatprep.subr.mxu0 0.0
        %1069 = vmatpush2.msra.mxu0 0.0
        %1070 = vmatprep.subr.mxu0 0.0
        %1071 = vmatpush2.msra.mxu0 0.0
        %1072 = vmatprep.subr.mxu0 0.0
        %1073 = vmatpush2.msra.mxu0 0.0
        %1074 = vmatprep.subr.mxu0 0.0
        %1075 = vmatpush2.msra.mxu0 0.0
        %1076 = vmatprep.subr.mxu0 0.0
        %1077 = vmatpush2.msra.mxu0 0.0
        %1078 = vmatprep.subr.mxu0 0.0
        %1079 = vmatpush2.msra.mxu0 0.0
        %1080 = vmatprep.subr.mxu0 0.0
        %1081 = vmatpush2.msra.mxu0 0.0
        %1082 = vmatprep.subr.mxu0 0.0
        %1083 = vmatpush2.msra.mxu0 0.0
        %1084 = vmatprep.mubr.f32.mxu0 0.0
        %1085 = vmatmul.mubr.f32.gmra.mxu0 %v1019
        %v1086 = vpop.f32.mrf.mxu0
        %v1087 = vadd.f32 0.0, %v1086
        %v1088 = vpop.f32.mrf.mxu0
        %1089 = vdwg.mxu0
        %v1090 = vmax.f32 %v1087, 0.0
        %v1091 = vadd.f32 %v1090, 1e-05
        %v1092 = vrsqrt.pop %v1091
        %v1093 = vlaneseq
        %v1094 = vshrl.u32 %v1093, 7
        %v1095 = vsub.s32 0, %v1094
        %v1096 = vrot.slane %v1092, %v1095
        %v1097 = vmul.f32 %v938, %v1096
        %v1098 = vmul.f32 %v939, %v1096
        %v1099 = vlaneseq
        %v1100 = vshrl.u32 %v1099, 7
        %v1101 = vsub.s32 1, %v1100
        %v1102 = vrot.slane %v419, %v1101
        %v1103 = vmul.f32 %v1097, %v1102
        %v1104 = vmul.f32 %v1098, %v1102
        %v1105 = vlaneseq
        %v1106 = vshrl.u32 %v1105, 7
        %v1107 = vsub.s32 2, %v1106
        %v1108 = vrot.slane %v419, %v1107
        %v1109 = vadd.f32 %v1103, %v1108
        %v1110 = vadd.f32 %v1104, %v1108
        %v1111 = vmax.f32 %v1109, 0.0
        %v1112 = vmax.f32 %v1110, 0.0
        %vm1113 = vcmp.ne.f32.partialorder %v1109, %v1109
        %vm1114 = vcmp.ne.f32.partialorder %v1110, %v1110
        %v1115 = vadd.f32 %v1109, 0.0
        %v1116 = vadd.f32 %v1110, 0.0
        %v1117 = vand.u32 2147483647, %v1109
        %v1118 = vand.u32 2147483647, %v1110
        %v1119 = vsub.f32 0.0, %v1117
        %v1120 = vsub.f32 0.0, %v1118
        %v1121 = vmul.f32 %v1119, 1.442695
        %v1122 = vpow.pop %v1121
        %v1123 = vmul.f32 %v1120, 1.442695
        %v1124 = vpow.pop %v1123
        %v1125 = vadd.f32 %v1122, 1.0
        %v1126 = vlog2.pop %v1125
        %v1127 = vmul.f32 %v1126, 0.6931472
        %v1128 = vmul.f32 -0.5, %v1122
        %v1129 = vadd.f32 %v1128, 1.0
        %v1130 = vmul.f32 %v1129, %v1122
        %v1131 = vand.u32 2147483647, %v1122
        %vm1132 = vcmp.lt.f32.partialorder %v1131, 0.0004427343
        %v1133 = vsel %vm1132, %v1130, %v1127
        %v1134 = vadd.f32 %v1124, 1.0
        %v1135 = vlog2.pop %v1134
        %v1136 = vmul.f32 %v1135, 0.6931472
        %v1137 = vmul.f32 -0.5, %v1124
        %v1138 = vadd.f32 %v1137, 1.0
        %v1139 = vmul.f32 %v1138, %v1124
        %v1140 = vand.u32 2147483647, %v1124
        %vm1141 = vcmp.lt.f32.partialorder %v1140, 0.0004427343
        %v1142 = vsel %vm1141, %v1139, %v1136
        %v1143 = vadd.f32 %v1111, %v1133
        %v1144 = vadd.f32 %v1112, %v1142
        %v1145 = vsel %vm1113, %v1115, %v1143
        %v1146 = vsel %vm1114, %v1116, %v1144
        %v1147 = vtanh.pop %v1145
        %v1148 = vtanh.pop %v1146
        %v1149 = vmul.f32 %v1109, %v1147
        %v1150 = vmul.f32 %v1110, %v1148
        %v1151 = vld [vmem:[%s417] sm:$0x1]
        %v1152 = vmax.f32 %v1151, 0.0
        %vm1153 = vcmp.ne.f32.partialorder %v1151, %v1151
        %v1154 = vadd.f32 %v1151, 0.0
        %v1155 = vand.u32 2147483647, %v1151
        %v1156 = vsub.f32 0.0, %v1155
        %v1157 = vmul.f32 %v1156, 1.442695
        %v1158 = vpow.pop %v1157
        %v1159 = vadd.f32 %v1158, 1.0
        %v1160 = vlog2.pop %v1159
        %v1161 = vmul.f32 %v1160, 0.6931472
        %v1162 = vmul.f32 -0.5, %v1158
        %v1163 = vadd.f32 %v1162, 1.0
        %v1164 = vmul.f32 %v1163, %v1158
        %v1165 = vand.u32 2147483647, %v1158
        %vm1166 = vcmp.lt.f32.partialorder %v1165, 0.0004427343
        %v1167 = vsel %vm1166, %v1164, %v1161
        %v1168 = vadd.f32 %v1152, %v1167
        %v1169 = vsel %vm1153, %v1154, %v1168
        %v1170 = vtanh.pop %v1169
        %v1171 = vmul.f32 %v1151, %v1170
        %v1172 = vpack.c.bf16 %v1171, %v1171
        %v1173 = vld [vmem:[%s4] sm:$0xf]
        %v1174 = vld [vmem:[%s4 + $0x4] sm:$0xf]
        %v1175 = vld [vmem:[%s4 + $0x8] sm:$0xf]
        %v1176 = vld [vmem:[%s4 + $0xc] sm:$0xf]
        %v1177 = vld [vmem:[%s4 + $0x10] sm:$0xf]
        %v1178 = vld [vmem:[%s4 + $0x14] sm:$0xf]
        %v1179 = vld [vmem:[%s4 + $0x18] sm:$0xf]
        %v1180 = vld [vmem:[%s4 + $0x1c] sm:$0xf]
        %v1181 = vld [vmem:[%s4 + $0x20] sm:$0xf]
        %v1182 = vld [vmem:[%s4 + $0x24] sm:$0xf]
        %v1183 = vld [vmem:[%s4 + $0x28] sm:$0xf]
        %v1184 = vld [vmem:[%s4 + $0x2c] sm:$0xf]
        %v1185 = vld [vmem:[%s4 + $0x30] sm:$0xf]
        %v1186 = vld [vmem:[%s4 + $0x34] sm:$0xf]
        %v1187 = vld [vmem:[%s4 + $0x38] sm:$0xf]
        %v1188 = vld [vmem:[%s4 + $0x3c] sm:$0xf]
        %v1205 = vunpack.c.l.b16 %v1173
        %v1206 = vunpack.c.l.b16 %v1174
        %v1207 = vunpack.c.l.b16 %v1175
        %v1208 = vunpack.c.l.b16 %v1176
        %v1209 = vunpack.c.l.b16 %v1177
        %v1210 = vunpack.c.l.b16 %v1178
        %v1211 = vunpack.c.l.b16 %v1179
        %v1212 = vunpack.c.l.b16 %v1180
        %v1213 = vunpack.c.l.b16 %v1181
        %v1214 = vunpack.c.l.b16 %v1182
        %v1215 = vunpack.c.l.b16 %v1183
        %v1216 = vunpack.c.l.b16 %v1184
        %v1217 = vunpack.c.l.b16 %v1185
        %v1218 = vunpack.c.l.b16 %v1186
        %v1219 = vunpack.c.l.b16 %v1187
        %v1220 = vunpack.c.l.b16 %v1188
        %v1221 = vpack.c.b16 %v1206, %v1205
        %v1222 = vpack.c.b16 %v1208, %v1207
        %v1223 = vpack.c.b16 %v1210, %v1209
        %v1224 = vpack.c.b16 %v1212, %v1211
        %v1225 = vpack.c.b16 %v1214, %v1213
        %v1226 = vpack.c.b16 %v1216, %v1215
        %v1227 = vpack.c.b16 %v1218, %v1217
        %v1228 = vpack.c.b16 %v1220, %v1219
        %v1238 = vrot.slane %v419, 6
        %1240 = vmatprep.subr.bf16.mxu0 0
        %1241 = vmatpush1.bf16.msra.mxu0 %v1228
        %1242 = vmatprep.subr.bf16.mxu0 0
        %1243 = vmatpush1.bf16.msra.mxu0 %v1227
        %1244 = vmatprep.subr.bf16.mxu0 0
        %1245 = vmatpush1.bf16.msra.mxu0 %v1226
        %1246 = vmatprep.subr.bf16.mxu0 0
        %1247 = vmatpush1.bf16.msra.mxu0 %v1225
        %1248 = vmatprep.subr.bf16.mxu0 0
        %1249 = vmatpush1.bf16.msra.mxu0 %v1224
        %1250 = vmatprep.subr.bf16.mxu0 0
        %1251 = vmatpush1.bf16.msra.mxu0 %v1223
        %1252 = vmatprep.subr.bf16.mxu0 0
        %1253 = vmatpush1.bf16.msra.mxu0 %v1222
        %1254 = vmatprep.subr.bf16.mxu0 0
        %1255 = vmatpush1.bf16.msra.mxu0 %v1221
        %1256 = vmatprep.subr.bf16.mxu0 0
        %1257 = vmatpush2.bf16.msra.mxu0 0
        %1258 = vmatprep.subr.bf16.mxu0 0
        %1259 = vmatpush2.bf16.msra.mxu0 0
        %1260 = vmatprep.subr.bf16.mxu0 0
        %1261 = vmatpush2.bf16.msra.mxu0 0
        %1262 = vmatprep.subr.bf16.mxu0 0
        %1263 = vmatpush2.bf16.msra.mxu0 0
        %1264 = vmatprep.subr.bf16.mxu0 0
        %1265 = vmatpush2.bf16.msra.mxu0 0
        %1266 = vmatprep.subr.bf16.mxu0 0
        %1267 = vmatpush2.bf16.msra.mxu0 0
        %1268 = vmatprep.subr.bf16.mxu0 0
        %1269 = vmatpush2.bf16.msra.mxu0 0
        %1270 = vmatprep.subr.bf16.mxu0 0
        %1271 = vmatpush2.bf16.msra.mxu0 0
        %1272 = vmatprep.mubr.bf16.mxu0 0
        %1273 = vmatmul.mubr.bf16.gmra.mxu0 %v1172
        %v1274 = vpop.f32.mrf.mxu0
        %v1275 = vadd.f32 %v1238, %v1274
        %v1276 = vpop.f32.mrf.mxu0
        %v1277 = vpop.f32.mrf.mxu0
        %v1278 = vpop.f32.mrf.mxu0
        %1279 = vdwg.mxu0
        %v1280 = vlaneseq
        %v1281 = vshrl.u32 %v1280, 7
        %v1282 = vsub.s32 0, %v1281
        %v1283 = vrot.slane %v1275, %v1282
        %v1284 = vadd.f32 %v1149, %v1283
        %v1285 = vadd.f32 %v1150, %v1283
        %1286 = vst [vmem:[#allocation2] sm:$0xff] 0.0
        %1287 = vst [vmem:[#allocation2 + $0x8] sm:$0xff] 0.0
        %1288 = vst [vmem:[#allocation2 + $0x10] sm:$0x3] 0.0
        %1289 = vst [vmem:[#allocation2 + $0x1] sm:$0xff] %v1284
        %1290 = vst [vmem:[#allocation2 + $0x9] sm:$0xff] %v1285
        %v1291 = vld [vmem:[#allocation2] sm:$0xff]
        %v1292 = vld [vmem:[#allocation2 + $0x8] sm:$0xff]
        %v1293 = vpack.c.bf16 %v1292, %v1291
        %v1294 = vld [vmem:[#allocation6] sm:$0xf]
        %v1295 = vld [vmem:[#allocation6 + $0x4] sm:$0xf]
        %v1296 = vld [vmem:[#allocation6 + $0x8] sm:$0xf]
        %v1297 = vld [vmem:[#allocation6 + $0xc] sm:$0xf]
        %v1298 = vld [vmem:[#allocation6 + $0x10] sm:$0xf]
        %v1299 = vld [vmem:[#allocation6 + $0x14] sm:$0xf]
        %v1300 = vld [vmem:[#allocation6 + $0x18] sm:$0xf]
        %v1301 = vld [vmem:[#allocation6 + $0x1c] sm:$0xf]
        %v1302 = vld [vmem:[#allocation6 + $0x20] sm:$0xf]
        %v1303 = vld [vmem:[#allocation6 + $0x24] sm:$0xf]
        %v1304 = vld [vmem:[#allocation6 + $0x28] sm:$0xf]
        %v1305 = vld [vmem:[#allocation6 + $0x2c] sm:$0xf]
        %v1306 = vld [vmem:[#allocation6 + $0x30] sm:$0xf]
        %v1307 = vld [vmem:[#allocation6 + $0x34] sm:$0xf]
        %v1308 = vld [vmem:[#allocation6 + $0x38] sm:$0xf]
        %v1309 = vld [vmem:[#allocation6 + $0x3c] sm:$0xf]
        %v1310 = vld [vmem:[#allocation2 + $0x1] sm:$0xff]
        %v1311 = vld [vmem:[#allocation2 + $0x9] sm:$0xff]
        %v1312 = vpack.c.bf16 %v1311, %v1310
        %s1313 = scalar_lea.vmem [#allocation6], 64
        %v1314 = vld [vmem:[%s1313] sm:$0xf]
        %v1315 = vld [vmem:[%s1313 + $0x4] sm:$0xf]
        %v1316 = vld [vmem:[%s1313 + $0x8] sm:$0xf]
        %v1317 = vld [vmem:[%s1313 + $0xc] sm:$0xf]
        %v1318 = vld [vmem:[%s1313 + $0x10] sm:$0xf]
        %v1319 = vld [vmem:[%s1313 + $0x14] sm:$0xf]
        %v1320 = vld [vmem:[%s1313 + $0x18] sm:$0xf]
        %v1321 = vld [vmem:[%s1313 + $0x1c] sm:$0xf]
        %v1322 = vld [vmem:[%s1313 + $0x20] sm:$0xf]
        %v1323 = vld [vmem:[%s1313 + $0x24] sm:$0xf]
        %v1324 = vld [vmem:[%s1313 + $0x28] sm:$0xf]
        %v1325 = vld [vmem:[%s1313 + $0x2c] sm:$0xf]
        %v1326 = vld [vmem:[%s1313 + $0x30] sm:$0xf]
        %v1327 = vld [vmem:[%s1313 + $0x34] sm:$0xf]
        %v1328 = vld [vmem:[%s1313 + $0x38] sm:$0xf]
        %v1329 = vld [vmem:[%s1313 + $0x3c] sm:$0xf]
        %v1346 = vunpack.c.l.b16 %v1314
        %v1347 = vunpack.c.l.b16 %v1315
        %v1348 = vunpack.c.l.b16 %v1316
        %v1349 = vunpack.c.l.b16 %v1317
        %v1350 = vunpack.c.l.b16 %v1318
        %v1351 = vunpack.c.l.b16 %v1319
        %v1352 = vunpack.c.l.b16 %v1320
        %v1353 = vunpack.c.l.b16 %v1321
        %v1354 = vunpack.c.l.b16 %v1322
        %v1355 = vunpack.c.l.b16 %v1323
        %v1356 = vunpack.c.l.b16 %v1324
        %v1357 = vunpack.c.l.b16 %v1325
        %v1358 = vunpack.c.l.b16 %v1326
        %v1359 = vunpack.c.l.b16 %v1327
        %v1360 = vunpack.c.l.b16 %v1328
        %v1361 = vunpack.c.l.b16 %v1329
        %v1362 = vpack.c.b16 %v1347, %v1346
        %v1363 = vpack.c.b16 %v1349, %v1348
        %v1364 = vpack.c.b16 %v1351, %v1350
        %v1365 = vpack.c.b16 %v1353, %v1352
        %v1366 = vpack.c.b16 %v1355, %v1354
        %v1367 = vpack.c.b16 %v1357, %v1356
        %v1368 = vpack.c.b16 %v1359, %v1358
        %v1369 = vpack.c.b16 %v1361, %v1360
        %1378 = vmatprep.subr.bf16.mxu0 0
        %1379 = vmatpush1.bf16.msra.mxu0 %v1369
        %1380 = vmatprep.subr.bf16.mxu0 0
        %1381 = vmatpush1.bf16.msra.mxu0 %v1368
        %1382 = vmatprep.subr.bf16.mxu0 0
        %1383 = vmatpush1.bf16.msra.mxu0 %v1367
        %1384 = vmatprep.subr.bf16.mxu0 0
        %1385 = vmatpush1.bf16.msra.mxu0 %v1366
        %1386 = vmatprep.subr.bf16.mxu0 0
        %1387 = vmatpush1.bf16.msra.mxu0 %v1365
        %1388 = vmatprep.subr.bf16.mxu0 0
        %1389 = vmatpush1.bf16.msra.mxu0 %v1364
        %1390 = vmatprep.subr.bf16.mxu0 0
        %1391 = vmatpush1.bf16.msra.mxu0 %v1363
        %1392 = vmatprep.subr.bf16.mxu0 0
        %1393 = vmatpush1.bf16.msra.mxu0 %v1362
        %1394 = vmatprep.subr.bf16.mxu0 0
        %1395 = vmatpush2.bf16.msra.mxu0 0
        %1396 = vmatprep.subr.bf16.mxu0 0
        %1397 = vmatpush2.bf16.msra.mxu0 0
        %1398 = vmatprep.subr.bf16.mxu0 0
        %1399 = vmatpush2.bf16.msra.mxu0 0
        %1400 = vmatprep.subr.bf16.mxu0 0
        %1401 = vmatpush2.bf16.msra.mxu0 0
        %1402 = vmatprep.subr.bf16.mxu0 0
        %1403 = vmatpush2.bf16.msra.mxu0 0
        %1404 = vmatprep.subr.bf16.mxu0 0
        %1405 = vmatpush2.bf16.msra.mxu0 0
        %1406 = vmatprep.subr.bf16.mxu0 0
        %1407 = vmatpush2.bf16.msra.mxu0 0
        %1408 = vmatprep.subr.bf16.mxu0 0
        %1409 = vmatpush2.bf16.msra.mxu0 0
        %1410 = vmatprep.mubr.bf16.mxu0 0
        %1411 = vmatmul.mubr.bf16.gmra.mxu0 %v1312
        %v1412 = vpop.f32.mrf.mxu0
        %v1413 = vadd.f32 0.0, %v1412
        %v1414 = vpop.f32.mrf.mxu0
        %v1415 = vpop.f32.mrf.mxu0
        %v1416 = vadd.f32 0.0, %v1415
        %v1417 = vpop.f32.mrf.mxu0
        %1418 = vdwg.mxu0
        %v1435 = vunpack.c.l.b16 %v1294
        %v1436 = vunpack.c.l.b16 %v1295
        %v1437 = vunpack.c.l.b16 %v1296
        %v1438 = vunpack.c.l.b16 %v1297
        %v1439 = vunpack.c.l.b16 %v1298
        %v1440 = vunpack.c.l.b16 %v1299
        %v1441 = vunpack.c.l.b16 %v1300
        %v1442 = vunpack.c.l.b16 %v1301
        %v1443 = vunpack.c.l.b16 %v1302
        %v1444 = vunpack.c.l.b16 %v1303
        %v1445 = vunpack.c.l.b16 %v1304
        %v1446 = vunpack.c.l.b16 %v1305
        %v1447 = vunpack.c.l.b16 %v1306
        %v1448 = vunpack.c.l.b16 %v1307
        %v1449 = vunpack.c.l.b16 %v1308
        %v1450 = vunpack.c.l.b16 %v1309
        %v1451 = vpack.c.b16 %v1436, %v1435
        %v1452 = vpack.c.b16 %v1438, %v1437
        %v1453 = vpack.c.b16 %v1440, %v1439
        %v1454 = vpack.c.b16 %v1442, %v1441
        %v1455 = vpack.c.b16 %v1444, %v1443
        %v1456 = vpack.c.b16 %v1446, %v1445
        %v1457 = vpack.c.b16 %v1448, %v1447
        %v1458 = vpack.c.b16 %v1450, %v1449
        %1467 = vmatprep.subr.bf16.mxu0 0
        %1468 = vmatpush1.bf16.msra.mxu0 %v1458
        %1469 = vmatprep.subr.bf16.mxu0 0
        %1470 = vmatpush1.bf16.msra.mxu0 %v1457
        %1471 = vmatprep.subr.bf16.mxu0 0
        %1472 = vmatpush1.bf16.msra.mxu0 %v1456
        %1473 = vmatprep.subr.bf16.mxu0 0
        %1474 = vmatpush1.bf16.msra.mxu0 %v1455
        %1475 = vmatprep.subr.bf16.mxu0 0
        %1476 = vmatpush1.bf16.msra.mxu0 %v1454
        %1477 = vmatprep.subr.bf16.mxu0 0
        %1478 = vmatpush1.bf16.msra.mxu0 %v1453
        %1479 = vmatprep.subr.bf16.mxu0 0
        %1480 = vmatpush1.bf16.msra.mxu0 %v1452
        %1481 = vmatprep.subr.bf16.mxu0 0
        %1482 = vmatpush1.bf16.msra.mxu0 %v1451
        %1483 = vmatprep.subr.bf16.mxu0 0
        %1484 = vmatpush2.bf16.msra.mxu0 0
        %1485 = vmatprep.subr.bf16.mxu0 0
        %1486 = vmatpush2.bf16.msra.mxu0 0
        %1487 = vmatprep.subr.bf16.mxu0 0
        %1488 = vmatpush2.bf16.msra.mxu0 0
        %1489 = vmatprep.subr.bf16.mxu0 0
        %1490 = vmatpush2.bf16.msra.mxu0 0
        %1491 = vmatprep.subr.bf16.mxu0 0
        %1492 = vmatpush2.bf16.msra.mxu0 0
        %1493 = vmatprep.subr.bf16.mxu0 0
        %1494 = vmatpush2.bf16.msra.mxu0 0
        %1495 = vmatprep.subr.bf16.mxu0 0
        %1496 = vmatpush2.bf16.msra.mxu0 0
        %1497 = vmatprep.subr.bf16.mxu0 0
        %1498 = vmatpush2.bf16.msra.mxu0 0
        %1499 = vmatprep.mubr.bf16.mxu0 0
        %1500 = vmatmul.mubr.bf16.gmra.mxu0 %v1293
        %v1501 = vpop.f32.mrf.mxu0
        %v1502 = vadd.f32 %v1413, %v1501
        %v1503 = vpop.f32.mrf.mxu0
        %v1504 = vpop.f32.mrf.mxu0
        %v1505 = vadd.f32 %v1416, %v1504
        %v1506 = vpop.f32.mrf.mxu0
        %1507 = vdwg.mxu0
        %v1508 = vld [vmem:[#allocation2 + $0x2] sm:$0xff]
        %v1509 = vld [vmem:[#allocation2 + $0xa] sm:$0xff]
        %v1510 = vpack.c.bf16 %v1509, %v1508
        %s1511 = scalar_lea.vmem [#allocation6], 128
        %v1512 = vld [vmem:[%s1511] sm:$0xf]
        %v1513 = vld [vmem:[%s1511 + $0x4] sm:$0xf]
        %v1514 = vld [vmem:[%s1511 + $0x8] sm:$0xf]
        %v1515 = vld [vmem:[%s1511 + $0xc] sm:$0xf]
        %v1516 = vld [vmem:[%s1511 + $0x10] sm:$0xf]
        %v1517 = vld [vmem:[%s1511 + $0x14] sm:$0xf]
        %v1518 = vld [vmem:[%s1511 + $0x18] sm:$0xf]
        %v1519 = vld [vmem:[%s1511 + $0x1c] sm:$0xf]
        %v1520 = vld [vmem:[%s1511 + $0x20] sm:$0xf]
        %v1521 = vld [vmem:[%s1511 + $0x24] sm:$0xf]
        %v1522 = vld [vmem:[%s1511 + $0x28] sm:$0xf]
        %v1523 = vld [vmem:[%s1511 + $0x2c] sm:$0xf]
        %v1524 = vld [vmem:[%s1511 + $0x30] sm:$0xf]
        %v1525 = vld [vmem:[%s1511 + $0x34] sm:$0xf]
        %v1526 = vld [vmem:[%s1511 + $0x38] sm:$0xf]
        %v1527 = vld [vmem:[%s1511 + $0x3c] sm:$0xf]
        %v1544 = vunpack.c.l.b16 %v1512
        %v1545 = vunpack.c.l.b16 %v1513
        %v1546 = vunpack.c.l.b16 %v1514
        %v1547 = vunpack.c.l.b16 %v1515
        %v1548 = vunpack.c.l.b16 %v1516
        %v1549 = vunpack.c.l.b16 %v1517
        %v1550 = vunpack.c.l.b16 %v1518
        %v1551 = vunpack.c.l.b16 %v1519
        %v1552 = vunpack.c.l.b16 %v1520
        %v1553 = vunpack.c.l.b16 %v1521
        %v1554 = vunpack.c.l.b16 %v1522
        %v1555 = vunpack.c.l.b16 %v1523
        %v1556 = vunpack.c.l.b16 %v1524
        %v1557 = vunpack.c.l.b16 %v1525
        %v1558 = vunpack.c.l.b16 %v1526
        %v1559 = vunpack.c.l.b16 %v1527
        %v1560 = vpack.c.b16 %v1545, %v1544
        %v1561 = vpack.c.b16 %v1547, %v1546
        %v1562 = vpack.c.b16 %v1549, %v1548
        %v1563 = vpack.c.b16 %v1551, %v1550
        %v1564 = vpack.c.b16 %v1553, %v1552
        %v1565 = vpack.c.b16 %v1555, %v1554
        %v1566 = vpack.c.b16 %v1557, %v1556
        %v1567 = vpack.c.b16 %v1559, %v1558
        %1576 = vmatprep.subr.bf16.mxu0 0
        %1577 = vmatpush1.bf16.msra.mxu0 %v1567
        %1578 = vmatprep.subr.bf16.mxu0 0
        %1579 = vmatpush1.bf16.msra.mxu0 %v1566
        %1580 = vmatprep.subr.bf16.mxu0 0
        %1581 = vmatpush1.bf16.msra.mxu0 %v1565
        %1582 = vmatprep.subr.bf16.mxu0 0
        %1583 = vmatpush1.bf16.msra.mxu0 %v1564
        %1584 = vmatprep.subr.bf16.mxu0 0
        %1585 = vmatpush1.bf16.msra.mxu0 %v1563
        %1586 = vmatprep.subr.bf16.mxu0 0
        %1587 = vmatpush1.bf16.msra.mxu0 %v1562
        %1588 = vmatprep.subr.bf16.mxu0 0
        %1589 = vmatpush1.bf16.msra.mxu0 %v1561
        %1590 = vmatprep.subr.bf16.mxu0 0
        %1591 = vmatpush1.bf16.msra.mxu0 %v1560
        %1592 = vmatprep.subr.bf16.mxu0 0
        %1593 = vmatpush2.bf16.msra.mxu0 0
        %1594 = vmatprep.subr.bf16.mxu0 0
        %1595 = vmatpush2.bf16.msra.mxu0 0
        %1596 = vmatprep.subr.bf16.mxu0 0
        %1597 = vmatpush2.bf16.msra.mxu0 0
        %1598 = vmatprep.subr.bf16.mxu0 0
        %1599 = vmatpush2.bf16.msra.mxu0 0
        %1600 = vmatprep.subr.bf16.mxu0 0
        %1601 = vmatpush2.bf16.msra.mxu0 0
        %1602 = vmatprep.subr.bf16.mxu0 0
        %1603 = vmatpush2.bf16.msra.mxu0 0
        %1604 = vmatprep.subr.bf16.mxu0 0
        %1605 = vmatpush2.bf16.msra.mxu0 0
        %1606 = vmatprep.subr.bf16.mxu0 0
        %1607 = vmatpush2.bf16.msra.mxu0 0
        %1608 = vmatprep.mubr.bf16.mxu0 0
        %1609 = vmatmul.mubr.bf16.gmra.mxu0 %v1510
        %v1610 = vpop.f32.mrf.mxu0
        %v1611 = vadd.f32 0.0, %v1610
        %v1612 = vpop.f32.mrf.mxu0
        %v1613 = vpop.f32.mrf.mxu0
        %v1614 = vadd.f32 0.0, %v1613
        %v1615 = vpop.f32.mrf.mxu0
        %1616 = vdwg.mxu0
        %v1617 = vadd.f32 %v1502, %v1611
        %v1618 = vadd.f32 %v1505, %v1614
        %v1619 = vlaneseq
        %v1620 = vshrl.u32 %v1619, 7
        %v1621 = vsub.s32 3, %v1620
        %v1622 = vrot.slane %v419, %v1621
        %v1623 = vadd.f32 %v1617, %v1622
        %v1624 = vadd.f32 %v1618, %v1622
        %v1625 = vadd.f32 %v1623, %v1624
        %v1626 = vrot.slane %v1625, 4
        %v1627 = vadd.f32 %v1625, %v1626
        %v1628 = vrot.slane %v1627, 2
        %v1629 = vadd.f32 %v1627, %v1628
        %v1630 = vrot.slane %v1629, 1
        %v1631 = vadd.f32 %v1629, %v1630
        %1632 = vmatprep.subr.mxu0 0.0
        %1633 = vmatpush1.msra.mxu0 %v435
        %1634 = vmatprep.subr.mxu0 0.0
        %1635 = vmatpush1.msra.mxu0 %v434
        %1636 = vmatprep.subr.mxu0 0.0
        %1637 = vmatpush1.msra.mxu0 %v433
        %1638 = vmatprep.subr.mxu0 0.0
        %1639 = vmatpush1.msra.mxu0 %v432
        %1640 = vmatprep.subr.mxu0 0.0
        %1641 = vmatpush1.msra.mxu0 %v431
        %1642 = vmatprep.subr.mxu0 0.0
        %1643 = vmatpush1.msra.mxu0 %v430
        %1644 = vmatprep.subr.mxu0 0.0
        %1645 = vmatpush1.msra.mxu0 %v429
        %1646 = vmatprep.subr.mxu0 0.0
        %1647 = vmatpush1.msra.mxu0 %v428
        %1648 = vmatprep.subr.mxu0 0.0
        %1649 = vmatpush1.msra.mxu0 %v427
        %1650 = vmatprep.subr.mxu0 0.0
        %1651 = vmatpush1.msra.mxu0 %v426
        %1652 = vmatprep.subr.mxu0 0.0
        %1653 = vmatpush1.msra.mxu0 %v425
        %1654 = vmatprep.subr.mxu0 0.0
        %1655 = vmatpush1.msra.mxu0 %v424
        %1656 = vmatprep.subr.mxu0 0.0
        %1657 = vmatpush1.msra.mxu0 %v423
        %1658 = vmatprep.subr.mxu0 0.0
        %1659 = vmatpush1.msra.mxu0 %v422
        %1660 = vmatprep.subr.mxu0 0.0
        %1661 = vmatpush1.msra.mxu0 %v421
        %1662 = vmatprep.subr.mxu0 0.0
        %1663 = vmatpush1.msra.mxu0 %v420
        %1664 = vmatprep.subr.mxu0 0.0
        %1665 = vmatpush2.msra.mxu0 0.0
        %1666 = vmatprep.subr.mxu0 0.0
        %1667 = vmatpush2.msra.mxu0 0.0
        %1668 = vmatprep.subr.mxu0 0.0
        %1669 = vmatpush2.msra.mxu0 0.0
        %1670 = vmatprep.subr.mxu0 0.0
        %1671 = vmatpush2.msra.mxu0 0.0
        %1672 = vmatprep.subr.mxu0 0.0
        %1673 = vmatpush2.msra.mxu0 0.0
        %1674 = vmatprep.subr.mxu0 0.0
        %1675 = vmatpush2.msra.mxu0 0.0
        %1676 = vmatprep.subr.mxu0 0.0
        %1677 = vmatpush2.msra.mxu0 0.0
        %1678 = vmatprep.subr.mxu0 0.0
        %1679 = vmatpush2.msra.mxu0 0.0
        %1680 = vmatprep.subr.mxu0 0.0
        %1681 = vmatpush2.msra.mxu0 0.0
        %1682 = vmatprep.subr.mxu0 0.0
        %1683 = vmatpush2.msra.mxu0 0.0
        %1684 = vmatprep.subr.mxu0 0.0
        %1685 = vmatpush2.msra.mxu0 0.0
        %1686 = vmatprep.subr.mxu0 0.0
        %1687 = vmatpush2.msra.mxu0 0.0
        %1688 = vmatprep.subr.mxu0 0.0
        %1689 = vmatpush2.msra.mxu0 0.0
        %1690 = vmatprep.subr.mxu0 0.0
        %1691 = vmatpush2.msra.mxu0 0.0
        %1692 = vmatprep.subr.mxu0 0.0
        %1693 = vmatpush2.msra.mxu0 0.0
        %1694 = vmatprep.subr.mxu0 0.0
        %1695 = vmatpush2.msra.mxu0 0.0
        %1696 = vmatprep.mubr.f32.mxu0 0.0
        %1697 = vmatmul.mubr.f32.gmra.mxu0 %v1631
        %v1698 = vpop.f32.mrf.mxu0
        %v1699 = vadd.f32 0.0, %v1698
        %v1700 = vpop.f32.mrf.mxu0
        %1701 = vdwg.mxu0
        %v1702 = vmul.f32 %v1699, 0.015625
        %1703 = vmatprep.subr.mxu0 0.0
        %1704 = vmatpush1.msra.mxu0 %v451
        %1705 = vmatprep.subr.mxu0 0.0
        %1706 = vmatpush1.msra.mxu0 %v450
        %1707 = vmatprep.subr.mxu0 0.0
        %1708 = vmatpush1.msra.mxu0 %v449
        %1709 = vmatprep.subr.mxu0 0.0
        %1710 = vmatpush1.msra.mxu0 %v448
        %1711 = vmatprep.subr.mxu0 0.0
        %1712 = vmatpush1.msra.mxu0 %v447
        %1713 = vmatprep.subr.mxu0 0.0
        %1714 = vmatpush1.msra.mxu0 %v446
        %1715 = vmatprep.subr.mxu0 0.0
        %1716 = vmatpush1.msra.mxu0 %v445
        %1717 = vmatprep.subr.mxu0 0.0
        %1718 = vmatpush1.msra.mxu0 %v444
        %1719 = vmatprep.subr.mxu0 0.0
        %1720 = vmatpush1.msra.mxu0 %v443
        %1721 = vmatprep.subr.mxu0 0.0
        %1722 = vmatpush1.msra.mxu0 %v442
        %1723 = vmatprep.subr.mxu0 0.0
        %1724 = vmatpush1.msra.mxu0 %v441
        %1725 = vmatprep.subr.mxu0 0.0
        %1726 = vmatpush1.msra.mxu0 %v440
        %1727 = vmatprep.subr.mxu0 0.0
        %1728 = vmatpush1.msra.mxu0 %v439
        %1729 = vmatprep.subr.mxu0 0.0
        %1730 = vmatpush1.msra.mxu0 %v438
        %1731 = vmatprep.subr.mxu0 0.0
        %1732 = vmatpush1.msra.mxu0 %v437
        %1733 = vmatprep.subr.mxu0 0.0
        %1734 = vmatpush1.msra.mxu0 %v436
        %1735 = vmatprep.subr.mxu0 0.0
        %1736 = vmatpush2.msra.mxu0 0.0
        %1737 = vmatprep.subr.mxu0 0.0
        %1738 = vmatpush2.msra.mxu0 0.0
        %1739 = vmatprep.subr.mxu0 0.0
        %1740 = vmatpush2.msra.mxu0 0.0
        %1741 = vmatprep.subr.mxu0 0.0
        %1742 = vmatpush2.msra.mxu0 0.0
        %1743 = vmatprep.subr.mxu0 0.0
        %1744 = vmatpush2.msra.mxu0 0.0
        %1745 = vmatprep.subr.mxu0 0.0
        %1746 = vmatpush2.msra.mxu0 0.0
        %1747 = vmatprep.subr.mxu0 0.0
        %1748 = vmatpush2.msra.mxu0 0.0
        %1749 = vmatprep.subr.mxu0 0.0
        %1750 = vmatpush2.msra.mxu0 0.0
        %1751 = vmatprep.subr.mxu0 0.0
        %1752 = vmatpush2.msra.mxu0 0.0
        %1753 = vmatprep.subr.mxu0 0.0
        %1754 = vmatpush2.msra.mxu0 0.0
        %1755 = vmatprep.subr.mxu0 0.0
        %1756 = vmatpush2.msra.mxu0 0.0
        %1757 = vmatprep.subr.mxu0 0.0
        %1758 = vmatpush2.msra.mxu0 0.0
        %1759 = vmatprep.subr.mxu0 0.0
        %1760 = vmatpush2.msra.mxu0 0.0
        %1761 = vmatprep.subr.mxu0 0.0
        %1762 = vmatpush2.msra.mxu0 0.0
        %1763 = vmatprep.subr.mxu0 0.0
        %1764 = vmatpush2.msra.mxu0 0.0
        %1765 = vmatprep.subr.mxu0 0.0
        %1766 = vmatpush2.msra.mxu0 0.0
        %1767 = vmatprep.mubr.f32.mxu0 0.0
        %1768 = vmatmul.mubr.f32.gmra.mxu0 %v1702
        %v1769 = vpop.f32.mrf.mxu0
        %v1770 = vadd.f32 0.0, %v1769
        %v1771 = vpop.f32.mrf.mxu0
        %1772 = vdwg.mxu0
        %v1773 = vlaneseq
        %v1774 = vshrl.u32 %v1773, 7
        %v1775 = vsub.s32 0, %v1774
        %v1776 = vrot.slane %v1770, %v1775
        %v1777 = vsub.f32 %v1623, %v1776
        %v1778 = vsub.f32 %v1624, %v1776
        %v1779 = vmul.f32 %v1777, %v1777
        %v1780 = vmul.f32 %v1778, %v1778
        %v1781 = vadd.f32 %v1779, %v1780
        %v1782 = vrot.slane %v1781, 4
        %v1783 = vadd.f32 %v1781, %v1782
        %v1784 = vrot.slane %v1783, 2
        %v1785 = vadd.f32 %v1783, %v1784
        %v1786 = vrot.slane %v1785, 1
        %v1787 = vadd.f32 %v1785, %v1786
        %1788 = vmatprep.subr.mxu0 0.0
        %1789 = vmatpush1.msra.mxu0 %v435
        %1790 = vmatprep.subr.mxu0 0.0
        %1791 = vmatpush1.msra.mxu0 %v434
        %1792 = vmatprep.subr.mxu0 0.0
        %1793 = vmatpush1.msra.mxu0 %v433
        %1794 = vmatprep.subr.mxu0 0.0
        %1795 = vmatpush1.msra.mxu0 %v432
        %1796 = vmatprep.subr.mxu0 0.0
        %1797 = vmatpush1.msra.mxu0 %v431
        %1798 = vmatprep.subr.mxu0 0.0
        %1799 = vmatpush1.msra.mxu0 %v430
        %1800 = vmatprep.subr.mxu0 0.0
        %1801 = vmatpush1.msra.mxu0 %v429
        %1802 = vmatprep.subr.mxu0 0.0
        %1803 = vmatpush1.msra.mxu0 %v428
        %1804 = vmatprep.subr.mxu0 0.0
        %1805 = vmatpush1.msra.mxu0 %v427
        %1806 = vmatprep.subr.mxu0 0.0
        %1807 = vmatpush1.msra.mxu0 %v426
        %1808 = vmatprep.subr.mxu0 0.0
        %1809 = vmatpush1.msra.mxu0 %v425
        %1810 = vmatprep.subr.mxu0 0.0
        %1811 = vmatpush1.msra.mxu0 %v424
        %1812 = vmatprep.subr.mxu0 0.0
        %1813 = vmatpush1.msra.mxu0 %v423
        %1814 = vmatprep.subr.mxu0 0.0
        %1815 = vmatpush1.msra.mxu0 %v422
        %1816 = vmatprep.subr.mxu0 0.0
        %1817 = vmatpush1.msra.mxu0 %v421
        %1818 = vmatprep.subr.mxu0 0.0
        %1819 = vmatpush1.msra.mxu0 %v420
        %1820 = vmatprep.subr.mxu0 0.0
        %1821 = vmatpush2.msra.mxu0 0.0
        %1822 = vmatprep.subr.mxu0 0.0
        %1823 = vmatpush2.msra.mxu0 0.0
        %1824 = vmatprep.subr.mxu0 0.0
        %1825 = vmatpush2.msra.mxu0 0.0
        %1826 = vmatprep.subr.mxu0 0.0
        %1827 = vmatpush2.msra.mxu0 0.0
        %1828 = vmatprep.subr.mxu0 0.0
        %1829 = vmatpush2.msra.mxu0 0.0
        %1830 = vmatprep.subr.mxu0 0.0
        %1831 = vmatpush2.msra.mxu0 0.0
        %1832 = vmatprep.subr.mxu0 0.0
        %1833 = vmatpush2.msra.mxu0 0.0
        %1834 = vmatprep.subr.mxu0 0.0
        %1835 = vmatpush2.msra.mxu0 0.0
        %1836 = vmatprep.subr.mxu0 0.0
        %1837 = vmatpush2.msra.mxu0 0.0
        %1838 = vmatprep.subr.mxu0 0.0
        %1839 = vmatpush2.msra.mxu0 0.0
        %1840 = vmatprep.subr.mxu0 0.0
        %1841 = vmatpush2.msra.mxu0 0.0
        %1842 = vmatprep.subr.mxu0 0.0
        %1843 = vmatpush2.msra.mxu0 0.0
        %1844 = vmatprep.subr.mxu0 0.0
        %1845 = vmatpush2.msra.mxu0 0.0
        %1846 = vmatprep.subr.mxu0 0.0
        %1847 = vmatpush2.msra.mxu0 0.0
        %1848 = vmatprep.subr.mxu0 0.0
        %1849 = vmatpush2.msra.mxu0 0.0
        %1850 = vmatprep.subr.mxu0 0.0
        %1851 = vmatpush2.msra.mxu0 0.0
        %1852 = vmatprep.mubr.f32.mxu0 0.0
        %1853 = vmatmul.mubr.f32.gmra.mxu0 %v1787
        %v1854 = vpop.f32.mrf.mxu0
        %v1855 = vadd.f32 0.0, %v1854
        %v1856 = vpop.f32.mrf.mxu0
        %1857 = vdwg.mxu0
        %v1858 = vmul.f32 %v1855, 0.015625
        %1859 = vmatprep.subr.mxu0 0.0
        %1860 = vmatpush1.msra.mxu0 %v451
        %1861 = vmatprep.subr.mxu0 0.0
        %1862 = vmatpush1.msra.mxu0 %v450
        %1863 = vmatprep.subr.mxu0 0.0
        %1864 = vmatpush1.msra.mxu0 %v449
        %1865 = vmatprep.subr.mxu0 0.0
        %1866 = vmatpush1.msra.mxu0 %v448
        %1867 = vmatprep.subr.mxu0 0.0
        %1868 = vmatpush1.msra.mxu0 %v447
        %1869 = vmatprep.subr.mxu0 0.0
        %1870 = vmatpush1.msra.mxu0 %v446
        %1871 = vmatprep.subr.mxu0 0.0
        %1872 = vmatpush1.msra.mxu0 %v445
        %1873 = vmatprep.subr.mxu0 0.0
        %1874 = vmatpush1.msra.mxu0 %v444
        %1875 = vmatprep.subr.mxu0 0.0
        %1876 = vmatpush1.msra.mxu0 %v443
        %1877 = vmatprep.subr.mxu0 0.0
        %1878 = vmatpush1.msra.mxu0 %v442
        %1879 = vmatprep.subr.mxu0 0.0
        %1880 = vmatpush1.msra.mxu0 %v441
        %1881 = vmatprep.subr.mxu0 0.0
        %1882 = vmatpush1.msra.mxu0 %v440
        %1883 = vmatprep.subr.mxu0 0.0
        %1884 = vmatpush1.msra.mxu0 %v439
        %1885 = vmatprep.subr.mxu0 0.0
        %1886 = vmatpush1.msra.mxu0 %v438
        %1887 = vmatprep.subr.mxu0 0.0
        %1888 = vmatpush1.msra.mxu0 %v437
        %1889 = vmatprep.subr.mxu0 0.0
        %1890 = vmatpush1.msra.mxu0 %v436
        %1891 = vmatprep.subr.mxu0 0.0
        %1892 = vmatpush2.msra.mxu0 0.0
        %1893 = vmatprep.subr.mxu0 0.0
        %1894 = vmatpush2.msra.mxu0 0.0
        %1895 = vmatprep.subr.mxu0 0.0
        %1896 = vmatpush2.msra.mxu0 0.0
        %1897 = vmatprep.subr.mxu0 0.0
        %1898 = vmatpush2.msra.mxu0 0.0
        %1899 = vmatprep.subr.mxu0 0.0
        %1900 = vmatpush2.msra.mxu0 0.0
        %1901 = vmatprep.subr.mxu0 0.0
        %1902 = vmatpush2.msra.mxu0 0.0
        %1903 = vmatprep.subr.mxu0 0.0
        %1904 = vmatpush2.msra.mxu0 0.0
        %1905 = vmatprep.subr.mxu0 0.0
        %1906 = vmatpush2.msra.mxu0 0.0
        %1907 = vmatprep.subr.mxu0 0.0
        %1908 = vmatpush2.msra.mxu0 0.0
        %1909 = vmatprep.subr.mxu0 0.0
        %1910 = vmatpush2.msra.mxu0 0.0
        %1911 = vmatprep.subr.mxu0 0.0
        %1912 = vmatpush2.msra.mxu0 0.0
        %1913 = vmatprep.subr.mxu0 0.0
        %1914 = vmatpush2.msra.mxu0 0.0
        %1915 = vmatprep.subr.mxu0 0.0
        %1916 = vmatpush2.msra.mxu0 0.0
        %1917 = vmatprep.subr.mxu0 0.0
        %1918 = vmatpush2.msra.mxu0 0.0
        %1919 = vmatprep.subr.mxu0 0.0
        %1920 = vmatpush2.msra.mxu0 0.0
        %1921 = vmatprep.subr.mxu0 0.0
        %1922 = vmatpush2.msra.mxu0 0.0
        %1923 = vmatprep.mubr.f32.mxu0 0.0
        %1924 = vmatmul.mubr.f32.gmra.mxu0 %v1858
        %v1925 = vpop.f32.mrf.mxu0
        %v1926 = vadd.f32 0.0, %v1925
        %v1927 = vpop.f32.mrf.mxu0
        %1928 = vdwg.mxu0
        %v1929 = vmax.f32 %v1926, 0.0
        %v1930 = vadd.f32 %v1929, 1e-05
        %v1931 = vrsqrt.pop %v1930
        %v1932 = vlaneseq
        %v1933 = vshrl.u32 %v1932, 7
        %v1934 = vsub.s32 0, %v1933
        %v1935 = vrot.slane %v1931, %v1934
        %v1936 = vmul.f32 %v1777, %v1935
        %v1937 = vmul.f32 %v1778, %v1935
        %v1938 = vlaneseq
        %v1939 = vshrl.u32 %v1938, 7
        %v1940 = vsub.s32 4, %v1939
        %v1941 = vrot.slane %v419, %v1940
        %v1942 = vmul.f32 %v1936, %v1941
        %v1943 = vmul.f32 %v1937, %v1941
        %v1944 = vlaneseq
        %v1945 = vshrl.u32 %v1944, 7
        %v1946 = vsub.s32 5, %v1945
        %v1947 = vrot.slane %v419, %v1946
        %v1948 = vadd.f32 %v1942, %v1947
        %v1949 = vadd.f32 %v1943, %v1947
        %v1950 = vmax.f32 %v1948, 0.0
        %v1951 = vmax.f32 %v1949, 0.0
        %vm1952 = vcmp.ne.f32.partialorder %v1948, %v1948
        %vm1953 = vcmp.ne.f32.partialorder %v1949, %v1949
        %v1954 = vadd.f32 %v1948, 0.0
        %v1955 = vadd.f32 %v1949, 0.0
        %v1956 = vand.u32 2147483647, %v1948
        %v1957 = vand.u32 2147483647, %v1949
        %v1958 = vsub.f32 0.0, %v1956
        %v1959 = vsub.f32 0.0, %v1957
        %v1960 = vmul.f32 %v1958, 1.442695
        %v1961 = vpow.pop %v1960
        %v1962 = vmul.f32 %v1959, 1.442695
        %v1963 = vpow.pop %v1962
        %v1964 = vadd.f32 %v1961, 1.0
        %v1965 = vlog2.pop %v1964
        %v1966 = vmul.f32 %v1965, 0.6931472
        %v1967 = vmul.f32 -0.5, %v1961
        %v1968 = vadd.f32 %v1967, 1.0
        %v1969 = vmul.f32 %v1968, %v1961
        %v1970 = vand.u32 2147483647, %v1961
        %vm1971 = vcmp.lt.f32.partialorder %v1970, 0.0004427343
        %v1972 = vsel %vm1971, %v1969, %v1966
        %v1973 = vadd.f32 %v1963, 1.0
        %v1974 = vlog2.pop %v1973
        %v1975 = vmul.f32 %v1974, 0.6931472
        %v1976 = vmul.f32 -0.5, %v1963
        %v1977 = vadd.f32 %v1976, 1.0
        %v1978 = vmul.f32 %v1977, %v1963
        %v1979 = vand.u32 2147483647, %v1963
        %vm1980 = vcmp.lt.f32.partialorder %v1979, 0.0004427343
        %v1981 = vsel %vm1980, %v1978, %v1975
        %v1982 = vadd.f32 %v1950, %v1972
        %v1983 = vadd.f32 %v1951, %v1981
        %v1984 = vsel %vm1952, %v1954, %v1982
        %v1985 = vsel %vm1953, %v1955, %v1983
        %v1986 = vtanh.pop %v1984
        %v1987 = vtanh.pop %v1985
        %v1988 = vmul.f32 %v1948, %v1986
        %v1989 = vmul.f32 %v1949, %v1987
        %v1990 = vld [vmem:[%s414 + $0x1] sm:$0xff]
        %v1991 = vld [vmem:[%s414 + $0x9] sm:$0xff]
        %v1992 = vpack.c.bf16 %v1991, %v1990
        %v1993 = vld [vmem:[#allocation8] sm:$0xf]
        %v1994 = vld [vmem:[#allocation8 + $0x4] sm:$0xf]
        %v1995 = vld [vmem:[#allocation8 + $0x8] sm:$0xf]
        %v1996 = vld [vmem:[#allocation8 + $0xc] sm:$0xf]
        %v1997 = vld [vmem:[#allocation8 + $0x10] sm:$0xf]
        %v1998 = vld [vmem:[#allocation8 + $0x14] sm:$0xf]
        %v1999 = vld [vmem:[#allocation8 + $0x18] sm:$0xf]
        %v2000 = vld [vmem:[#allocation8 + $0x1c] sm:$0xf]
        %v2001 = vld [vmem:[#allocation8 + $0x20] sm:$0xf]
        %v2002 = vld [vmem:[#allocation8 + $0x24] sm:$0xf]
        %v2003 = vld [vmem:[#allocation8 + $0x28] sm:$0xf]
        %v2004 = vld [vmem:[#allocation8 + $0x2c] sm:$0xf]
        %v2005 = vld [vmem:[#allocation8 + $0x30] sm:$0xf]
        %v2006 = vld [vmem:[#allocation8 + $0x34] sm:$0xf]
        %v2007 = vld [vmem:[#allocation8 + $0x38] sm:$0xf]
        %v2008 = vld [vmem:[#allocation8 + $0x3c] sm:$0xf]
        %v2009 = vlaneseq
        %v2010 = vshrl.u32 %v2009, 7
        %v2011 = vsub.s32 7, %v2010
        %v2012 = vrot.slane %v419, %v2011
        %v2029 = vunpack.c.l.b16 %v1993
        %v2030 = vunpack.c.l.b16 %v1994
        %v2031 = vunpack.c.l.b16 %v1995
        %v2032 = vunpack.c.l.b16 %v1996
        %v2033 = vunpack.c.l.b16 %v1997
        %v2034 = vunpack.c.l.b16 %v1998
        %v2035 = vunpack.c.l.b16 %v1999
        %v2036 = vunpack.c.l.b16 %v2000
        %v2037 = vunpack.c.l.b16 %v2001
        %v2038 = vunpack.c.l.b16 %v2002
        %v2039 = vunpack.c.l.b16 %v2003
        %v2040 = vunpack.c.l.b16 %v2004
        %v2041 = vunpack.c.l.b16 %v2005
        %v2042 = vunpack.c.l.b16 %v2006
        %v2043 = vunpack.c.l.b16 %v2007
        %v2044 = vunpack.c.l.b16 %v2008
        %v2045 = vpack.c.b16 %v2030, %v2029
        %v2046 = vpack.c.b16 %v2032, %v2031
        %v2047 = vpack.c.b16 %v2034, %v2033
        %v2048 = vpack.c.b16 %v2036, %v2035
        %v2049 = vpack.c.b16 %v2038, %v2037
        %v2050 = vpack.c.b16 %v2040, %v2039
        %v2051 = vpack.c.b16 %v2042, %v2041
        %v2052 = vpack.c.b16 %v2044, %v2043
        %2061 = vmatprep.subr.bf16.mxu0 0
        %2062 = vmatpush1.bf16.msra.mxu0 %v2052
        %2063 = vmatprep.subr.bf16.mxu0 0
        %2064 = vmatpush1.bf16.msra.mxu0 %v2051
        %2065 = vmatprep.subr.bf16.mxu0 0
        %2066 = vmatpush1.bf16.msra.mxu0 %v2050
        %2067 = vmatprep.subr.bf16.mxu0 0
        %2068 = vmatpush1.bf16.msra.mxu0 %v2049
        %2069 = vmatprep.subr.bf16.mxu0 0
        %2070 = vmatpush1.bf16.msra.mxu0 %v2048
        %2071 = vmatprep.subr.bf16.mxu0 0
        %2072 = vmatpush1.bf16.msra.mxu0 %v2047
        %2073 = vmatprep.subr.bf16.mxu0 0
        %2074 = vmatpush1.bf16.msra.mxu0 %v2046
        %2075 = vmatprep.subr.bf16.mxu0 0
        %2076 = vmatpush1.bf16.msra.mxu0 %v2045
        %2077 = vmatprep.subr.bf16.mxu0 0
        %2078 = vmatpush2.bf16.msra.mxu0 0
        %2079 = vmatprep.subr.bf16.mxu0 0
        %2080 = vmatpush2.bf16.msra.mxu0 0
        %2081 = vmatprep.subr.bf16.mxu0 0
        %2082 = vmatpush2.bf16.msra.mxu0 0
        %2083 = vmatprep.subr.bf16.mxu0 0
        %2084 = vmatpush2.bf16.msra.mxu0 0
        %2085 = vmatprep.subr.bf16.mxu0 0
        %2086 = vmatpush2.bf16.msra.mxu0 0
        %2087 = vmatprep.subr.bf16.mxu0 0
        %2088 = vmatpush2.bf16.msra.mxu0 0
        %2089 = vmatprep.subr.bf16.mxu0 0
        %2090 = vmatpush2.bf16.msra.mxu0 0
        %2091 = vmatprep.subr.bf16.mxu0 0
        %2092 = vmatpush2.bf16.msra.mxu0 0
        %2093 = vmatprep.mubr.bf16.mxu0 0
        %2094 = vmatmul.mubr.bf16.gmra.mxu0 %v1992
        %v2095 = vpop.f32.mrf.mxu0
        %v2096 = vadd.f32 %v2012, %v2095
        %v2097 = vpop.f32.mrf.mxu0
        %v2098 = vpop.f32.mrf.mxu0
        %v2099 = vadd.f32 %v2012, %v2098
        %v2100 = vpop.f32.mrf.mxu0
        %2101 = vdwg.mxu0
        %v2102 = vadd.f32 %v1988, %v2096
        %v2103 = vadd.f32 %v1989, %v2099
        %2104 = vst [vmem:[%s409] sm:$0xff] %v2102
        %2105 = vst [vmem:[%s409 + $0x8] sm:$0xff] %v2103
        %s2106 = sand.u32 %s233, 1
        %s2107 = scalar_lea.sflag [#allocation5], %s2106
        %s2108 = sand.u32 %s233, 1
        %s2109 = smul.addr %s2108, 16
        %s2110 = scalar_lea.vmem [#allocation12], %s2109
        // Predicated region
        $region77: #{tpu_custom_call.1} parent=55 // pred_check
          %p2111 = pneg %p243
        $region78: #{tpu_custom_call.1} parent=55 // pred_check_branch
          %2113 = sbr.rel (%p2111) target = $region80
        $region79: #{tpu_custom_call.1} parent=55 // pred_region
          %s2115 = ssub.s32 256, 256
          %2116 = vsyncadd %s2107, %s2115
          %s2117 = smul.addr %s26, 2
          %s2118 = smul.addr %s2117, 128
          %s2119 = scalar_lea.hbm %s9, %s2118
          %s2120 = sshll.u32 %s2110, 4
          %s2121 = int_to_ptr.vmem [resolvable:$true] %s2120
          %2126 = dma.vmem_to_hbm [thread:$0]  %s2121, 256, %s2119, %s2107, 128, 128, 8
        $region80: #{tpu_custom_call.1} parent=55 // pred_fallthru
          _
      $region56: #{tpu_custom_call.1} parent=5 // pred_fallthru
        _
      %p2127 = scmp.le.s32.totalorder 2, %s21
      // Predicated region
      $region81: #{tpu_custom_call.1} parent=5 // pred_check
        %p2128 = pneg %p2127
      $region82: #{tpu_custom_call.1} parent=5 // pred_check_branch
        %2130 = sbr.rel (%p2128) target = $region84
      $region83: #{tpu_custom_call.1} parent=5 // pred_region
        %s2131 = ssub.s32 %s21, 2
        // Predicated region
        $region85: #{tpu_custom_call.1} parent=83 // pred_check
          %p2132 = pneg %p249
        $region86: #{tpu_custom_call.1} parent=83 // pred_check_branch
          %2134 = sbr.rel (%p2132) target = $region88
        $region87: #{tpu_custom_call.1} parent=83 // pred_region
          %s2135 = sand.u32 %s234, 1
          %s2136 = scalar_lea.sflag [#allocation5], %s2135
          %s2137 = sand.u32 %s234, 1
          %s2138 = smul.addr %s2137, 16
          %s2139 = scalar_lea.vmem [#allocation12], %s2138
          %2140 = dma.done %s2136, 256
        $region88: #{tpu_custom_call.1} parent=83 // pred_fallthru
          _
      $region84: #{tpu_custom_call.1} parent=5 // pred_fallthru
        _
    $region6: #{tpu_custom_call.1} parent=1 // loop_footer
      %s25 = sadd.s32 1, %s21
    $region7: #{tpu_custom_call.1} parent=1 // loop_footer_branch
      %20 = sbr.rel target = $region3
    $region8: #{tpu_custom_call.1} parent=1 // loop_exit
      _
    %2141 = vsyncpa [#allocation4], 1
    %s2142 = scalar_lea.sflag [#allocation4], 1
    %2143 = vsyncpa %s2142, 1
    %2144 = vsyncpa [#allocation7], 1
    %2145 = vsyncpa [#allocation10], 1
    %2146 = vsyncpa [#allocation5], 1
    %s2147 = scalar_lea.sflag [#allocation5], 1
    %2148 = vsyncpa %s2147, 1

</llo_original>
